<compile_context>
chip_gen: v7x
topology: tpu7x:2x2x1
jax: 0.10.0
libtpu: 0.0.40
codegen_flags: <defaults>
</compile_context>

<pallas_src>
import functools

import numpy as np
import jax
import jax.numpy as jnp
from jax import lax
from jax.experimental import pallas as pl
from jax.experimental.pallas import tpu as pltpu


DPAD = 128            # lane-dense feature width (logical dim is zero-padded)
ROW_TILE = 256        # node-row tile (M dim of A @ X)
K_TILE = 512          # reduction tile over source nodes
NODE_ALIGN = 512      # lcm(ROW_TILE, K_TILE): node count padded to this


def _round_up(x, m):
    return ((x + m - 1) // m) * m


def _params(*dims):
    # Tiles here are small (<= ~0.5 MiB per buffer), well inside every
    # generation's scoped VMEM; the explicit limit just keeps headroom on v7x.
    return pltpu.CompilerParams(dimension_semantics=dims,
                                vmem_limit_bytes=32 * 1024 * 1024)


# ----------------------- Kernel 1: LightGCN propagation ----------------------
# Computes x_next = A @ x (bf16 out) and acc_out = acc_in + A @ x (f32 out)
# in one pass: the running layer-sum is fused into the matmul epilogue.
def _prop_kernel(a_ref, x_ref, accin_ref, xout_ref, accout_ref, acc_sc):
    k = pl.program_id(1)

    @pl.when(k == 0)
    def _():
        acc_sc[...] = jnp.zeros_like(acc_sc)

    acc_sc[...] += jnp.dot(a_ref[...], x_ref[...],
                           preferred_element_type=jnp.float32)

    @pl.when(k == pl.num_programs(1) - 1)
    def _():
        xout_ref[...] = acc_sc[...].astype(xout_ref.dtype)
        accout_ref[...] = accin_ref[...] + acc_sc[...]


def gcn_propagate(a_bf16, x_bf16, acc_f32):
    """One LightGCN layer: returns (A @ x as bf16, acc + A @ x as f32)."""
    n_pad, dpad = acc_f32.shape
    tm = min(ROW_TILE, n_pad)
    tk = min(K_TILE, n_pad)
    grid = (n_pad // tm, n_pad // tk)
    return pl.pallas_call(
        _prop_kernel,
        out_shape=(jax.ShapeDtypeStruct((n_pad, dpad), jnp.bfloat16),
                   jax.ShapeDtypeStruct((n_pad, dpad), jnp.float32)),
        grid_spec=pltpu.PrefetchScalarGridSpec(
            num_scalar_prefetch=0,
            grid=grid,
            in_specs=[
                pl.BlockSpec((tm, tk), lambda i, k: (i, k)),     # A tile (bf16)
                pl.BlockSpec((tk, dpad), lambda i, k: (k, 0)),   # X tile (bf16)
                pl.BlockSpec((tm, dpad), lambda i, k: (i, 0)),   # running sum
            ],
            out_specs=[
                pl.BlockSpec((tm, dpad), lambda i, k: (i, 0)),   # A @ X
                pl.BlockSpec((tm, dpad), lambda i, k: (i, 0)),   # acc + A @ X
            ],
            scratch_shapes=[pltpu.VMEM((tm, dpad), jnp.float32)]),
        compiler_params=_params("parallel", "arbitrary"),
    )(a_bf16, x_bf16, acc_f32)


# ---------------- Kernel 2: attention gate + branch fusion -------------------
# z_p = acc_p * scale; z_n = acc_n * scale (scale = 1/(num_layers+1), fused)
# h_* = tanh(z_* @ W^T + b); w_* = <h_*, q>; alpha = softmax([w_p, w_n])
# Z = alpha_p * z_p + alpha_n * z_n
def _attn_fuse_kernel(zp_ref, zn_ref, wt_ref, b_ref, q_ref, z_ref, *, scale):
    zp = zp_ref[...] * scale                                 # (rows, D)
    zn = zn_ref[...] * scale                                 # (rows, D)
    wt = wt_ref[...]
    b = b_ref[...]
    q = q_ref[...]
    hp = jnp.tanh(jnp.dot(zp, wt, preferred_element_type=jnp.float32) + b)
    hn = jnp.tanh(jnp.dot(zn, wt, preferred_element_type=jnp.float32) + b)
    # TODO(synk): F.dropout(p=0.5) is identity in eval mode; training-mode
    # dropout (random mask + 2x rescale) is not implemented here.
    wp = jnp.sum(hp * q, axis=-1, keepdims=True)             # (rows, 1)
    wn = jnp.sum(hn * q, axis=-1, keepdims=True)             # (rows, 1)
    m = jnp.maximum(wp, wn)
    ep = jnp.exp(wp - m)
    en = jnp.exp(wn - m)
    inv = pl.reciprocal(ep + en, approx=True)
    z_ref[...] = (ep * inv) * zp + (en * inv) * zn


def attn_fuse(acc_p, acc_n, attn_wT, attn_b, q_row, scale):
    n_pad, dpad = acc_p.shape
    tm = min(ROW_TILE, n_pad)
    return pl.pallas_call(
        functools.partial(_attn_fuse_kernel, scale=scale),
        out_shape=jax.ShapeDtypeStruct((n_pad, dpad), jnp.float32),
        grid_spec=pltpu.PrefetchScalarGridSpec(
            num_scalar_prefetch=0,
            grid=(n_pad // tm,),
            in_specs=[
                pl.BlockSpec((tm, dpad), lambda i: (i, 0)),
                pl.BlockSpec((tm, dpad), lambda i: (i, 0)),
                pl.BlockSpec((dpad, dpad), lambda i: (0, 0)),    # attn.weight.T
                pl.BlockSpec((1, dpad), lambda i: (0, 0)),       # attn.bias
                pl.BlockSpec((1, dpad), lambda i: (0, 0)),       # q.weight row
            ],
            out_specs=pl.BlockSpec((tm, dpad), lambda i: (i, 0))),
        compiler_params=_params("parallel"),
    )(acc_p, acc_n, attn_wT, attn_b, q_row)


# ------------------------ Kernel 3: BPR + reg loss ---------------------------
def _bpr_kernel(u_ref, v_ref, n_ref, w_ref, o_ref, *, reg, valid_b):
    u = u_ref[...]                                           # (BP, D)
    v = v_ref[...]                                           # (BP, D)
    n = n_ref[...]                                           # (BP, K, D)
    w = w_ref[...]                                           # (BP, 1)
    pos = jnp.sum(u * v, axis=1, keepdims=True)              # (BP, 1)
    neg = jnp.sum(u[:, None, :] * n, axis=2)                 # (BP, K)
    sgn = -0.5 * jnp.sign(w) + 1.5                           # (BP, 1)
    x = sgn * pos - neg                                      # (BP, K)
    # numerically-stable logsigmoid
    logsig = jnp.minimum(x, 0.0) - jnp.log(1.0 + jnp.exp(-jnp.abs(x)))
    row = lax.broadcasted_iota(jnp.int32, x.shape, 0)
    mask = (row < valid_b).astype(jnp.float32)               # drop padded rows
    bpr_sum = jnp.sum(logsig * mask)
    reg_loss = jnp.sum(u * u) + jnp.sum(v * v) + jnp.sum(n * n)
    o_ref[0, 0] = -bpr_sum + reg * reg_loss


def bpr_loss(u_e, v_e, n_e, w, reg):
    B, D = u_e.shape
    K = n_e.shape[1]
    BP = _round_up(B, 8)
    pad = BP - B
    if pad:
        u_e = jnp.pad(u_e, ((0, pad), (0, 0)))
        v_e = jnp.pad(v_e, ((0, pad), (0, 0)))
        n_e = jnp.pad(n_e, ((0, pad), (0, 0), (0, 0)))
        w = jnp.pad(w, ((0, pad),))
    w_col = w.reshape(BP, 1).astype(jnp.float32)
    out = pl.pallas_call(
        functools.partial(_bpr_kernel, reg=reg, valid_b=B),
        out_shape=jax.ShapeDtypeStruct((1, 1), jnp.float32),
        in_specs=[pl.BlockSpec((BP, D), lambda: (0, 0)),
                  pl.BlockSpec((BP, D), lambda: (0, 0)),
                  pl.BlockSpec((BP, K, D), lambda: (0, 0, 0)),
                  pl.BlockSpec((BP, 1), lambda: (0, 0))],
        out_specs=pl.BlockSpec(memory_space=pltpu.MemorySpace.SMEM),
    )(u_e, v_e, n_e, w_col)
    return out[0, 0]


# ----------------------------- model glue ------------------------------------
def build_norm_adj(src, dst, n_pad):
    """Dense D^{-1/2} A D^{-1/2} (node-padded, bf16) from a directed edge list."""
    src = jnp.asarray(src, jnp.int32)
    dst = jnp.asarray(dst, jnp.int32)
    deg = jnp.zeros((n_pad,), jnp.float32).at[dst].add(1.0)
    dinv = jnp.where(deg > 0, 1.0 / jnp.sqrt(deg), 0.0)
    vals = dinv[src] * dinv[dst]
    a = jnp.zeros((n_pad, n_pad), jnp.float32).at[dst, src].add(vals)
    return a.astype(jnp.bfloat16)


def pad_params(E1, E2, attn_wT, attn_b, q_row, n_pad):
    def pad2(x, r, c):
        return jnp.pad(x, ((0, r - x.shape[0]), (0, c - x.shape[1])))
    return {
        "E1": pad2(E1, n_pad, DPAD),
        "E2": pad2(E2, n_pad, DPAD),
        "attn_wT": pad2(attn_wT, DPAD, DPAD),
        "attn_b": pad2(attn_b, 1, DPAD),
        "q_row": pad2(q_row, 1, DPAD),
    }


def get_embedding(params, A_p, A_n, num_layers):
    E1, E2 = params["E1"], params["E2"]

    # positive branch: running sum starts at E1, propagates from E1
    acc_p = E1
    x = E1.astype(jnp.bfloat16)
    for _ in range(num_layers):
        x, acc_p = gcn_propagate(A_p, x, acc_p)

    # negative branch: running sum starts at E2 but propagates from E1
    # (matches the PyTorch reference).
    acc_n = E2
    x = E1.astype(jnp.bfloat16)
    for _ in range(num_layers):
        x, acc_n = gcn_propagate(A_n, x, acc_n)

    scale = 1.0 / float(num_layers + 1)   # layer average, fused into the gate
    return attn_fuse(acc_p, acc_n, params["attn_wT"], params["attn_b"],
                     params["q_row"], scale)


def pngnn_forward(params, A_p, A_n, u, v, w, n, *, num_layers, reg):
    emb = get_embedding(params, A_p, A_n, num_layers)
    u_e = emb[u]                       # (B, DPAD)   gather: plain JAX glue
    v_e = emb[v]                       # (B, DPAD)
    n_e = emb[n]                       # (B, K, DPAD)
    return bpr_loss(u_e, v_e, n_e, w.astype(jnp.float32), reg)


if __name__ == "__main__":
    key = jax.random.PRNGKey(0)
    M, N, dim = 8, 8, 32
    num_layers, reg, threshold = 2, 1e-4, 3.0
    num_nodes = M + N
    n_pad = _round_up(num_nodes, NODE_ALIGN)

    (k_u, k_i, k_r, k_e1, k_e2, k_aw, k_ab, k_q,
     k_bu, k_bv, k_bn, k_bw) = jax.random.split(key, 12)

    # synthetic "train" interactions (ratings 1..5)
    n_inter = 64
    users = jax.random.randint(k_u, (n_inter,), 0, M)      # 0-based user ids
    items = jax.random.randint(k_i, (n_inter,), 0, N)      # 0-based item ids
    ratings = jax.random.randint(k_r, (n_inter,), 1, 6).astype(jnp.float32)

    users_np = np.asarray(users)
    items_np = np.asarray(items)
    ratings_np = np.asarray(ratings)
    pm = ratings_np > threshold
    nm = ~pm
    pu, pi = users_np[pm], items_np[pm] + M
    nu, ni = users_np[nm], items_np[nm] + M
    # undirected bipartite edges (both directions), as in the reference
    src_p = np.concatenate([pu, pi]); dst_p = np.concatenate([pi, pu])
    src_n = np.concatenate([nu, ni]); dst_n = np.concatenate([ni, nu])
    A_p = build_norm_adj(src_p, dst_p, n_pad)
    A_n = build_norm_adj(src_n, dst_n, n_pad)

    xavier_std = (2.0 / (num_nodes + dim)) ** 0.5
    lin_std = 1.0 / (dim ** 0.5)
    E1 = xavier_std * jax.random.normal(k_e1, (num_nodes, dim), jnp.float32)
    E2 = xavier_std * jax.random.normal(k_e2, (num_nodes, dim), jnp.float32)
    attn_wT = lin_std * jax.random.normal(k_aw, (dim, dim), jnp.float32)
    attn_b = lin_std * jax.random.normal(k_ab, (1, dim), jnp.float32)
    q_row = lin_std * jax.random.normal(k_q, (1, dim), jnp.float32)
    params = pad_params(E1, E2, attn_wT, attn_b, q_row, n_pad)

    # one training batch: users, positive items, K negative items, ratings
    B, K = 8, 4
    u_idx = jax.random.randint(k_bu, (B,), 0, M)
    v_idx = jax.random.randint(k_bv, (B,), 0, N) + M
    n_idx = jax.random.randint(k_bn, (B, K), 0, N) + M
    w_batch = jax.random.randint(k_bw, (B,), 1, 6).astype(jnp.float32)

    loss = pngnn_forward(params, A_p, A_n, u_idx, v_idx, w_batch, n_idx,
                         num_layers=num_layers, reg=reg)
    loss = jax.block_until_ready(loss)
    assert loss.shape == () and bool(jnp.isfinite(loss))
    print("KERNEL_OK")
</pallas_src>

<mosaic_0001>
module attributes {stable_mosaic.version = 11 : i64} {
  func.func @_prop_kernel(%arg0: i32, %arg1: i32, %arg2: memref<256x512xbf16, #tpu.memory_space<vmem>>, %arg3: memref<512x128xbf16, #tpu.memory_space<vmem>>, %arg4: memref<256x128xf32, #tpu.memory_space<vmem>>, %arg5: memref<256x128xbf16, #tpu.memory_space<vmem>>, %arg6: memref<256x128xf32, #tpu.memory_space<vmem>>, %arg7: memref<256x128xf32, #tpu.memory_space<vmem>>) attributes {dimension_semantics = [#tpu.dimension_semantics<parallel>, #tpu.dimension_semantics<arbitrary>], iteration_bounds = array<i64: 2, 1>, scalar_prefetch = 0 : i64, scratch_operands = 1 : i64, tpu.core_type = #tpu.core_type<tc>, window_params = [{transform_indices = @transform_0, window_bounds = array<i64: 256, 512>}, {transform_indices = @transform_1, window_bounds = array<i64: 512, 128>}, {transform_indices = @transform_2, window_bounds = array<i64: 256, 128>}, {transform_indices = @transform_3, window_bounds = array<i64: 256, 128>}, {transform_indices = @transform_4, window_bounds = array<i64: 256, 128>}]} {
    %c0_i32 = arith.constant 0 : i32
    %0 = arith.cmpi eq, %arg1, %c0_i32 : i32
    %1 = arith.extui %0 : i1 to i32
    %c0_i32_0 = arith.constant 0 : i32
    %2 = arith.cmpi ne, %1, %c0_i32_0 : i32
    scf.if %2 {
      %cst_10 = arith.constant 0.000000e+00 : f32
      %12 = vector.broadcast %cst_10 : f32 to vector<256x128xf32>
      %c0_11 = arith.constant 0 : index
      %c0_12 = arith.constant 0 : index
      %13 = vector.load %arg7[%c0_11, %c0_12] : memref<256x128xf32, #tpu.memory_space<vmem>>, vector<256x128xf32>
      tpu.vector_store %arg7[%c0_11, %c0_12], %12 {strides = array<i32>} : memref<256x128xf32, #tpu.memory_space<vmem>>, vector<256x128xf32>,
    } else {
    }
    %c0 = arith.constant 0 : index
    %c0_1 = arith.constant 0 : index
    %3 = vector.load %arg7[%c0, %c0_1] : memref<256x128xf32, #tpu.memory_space<vmem>>, vector<256x128xf32>
    %c0_2 = arith.constant 0 : index
    %c0_3 = arith.constant 0 : index
    %4 = vector.load %arg2[%c0_2, %c0_3] : memref<256x512xbf16, #tpu.memory_space<vmem>>, vector<256x512xbf16>
    %c0_4 = arith.constant 0 : index
    %c0_5 = arith.constant 0 : index
    %5 = vector.load %arg3[%c0_4, %c0_5] : memref<512x128xbf16, #tpu.memory_space<vmem>>, vector<512x128xbf16>
    %cst = arith.constant dense<0.000000e+00> : vector<256x128xf32>
    %6 = tpu.matmul %4, %5, %cst {dimension_numbers = #tpu.dot_dimension_numbers<[1], [0], [0], [1], [0, 0, 1, 1], [], []>} : vector<256x512xbf16>, vector<512x128xbf16>, vector<256x128xf32> -> vector<256x128xf32>
    %7 = arith.addf %3, %6 : vector<256x128xf32>
    %c0_6 = arith.constant 0 : index
    %c0_7 = arith.constant 0 : index
    %8 = vector.load %arg7[%c0_6, %c0_7] : memref<256x128xf32, #tpu.memory_space<vmem>>, vector<256x128xf32>
    tpu.vector_store %arg7[%c0_6, %c0_7], %7 {strides = array<i32>} : memref<256x128xf32, #tpu.memory_space<vmem>>, vector<256x128xf32>,
    %c0_i32_8 = arith.constant 0 : i32
    %9 = arith.cmpi eq, %arg1, %c0_i32_8 : i32
    %10 = arith.extui %9 : i1 to i32
    %c0_i32_9 = arith.constant 0 : i32
    %11 = arith.cmpi ne, %10, %c0_i32_9 : i32
    scf.if %11 {
      %c0_10 = arith.constant 0 : index
      %c0_11 = arith.constant 0 : index
      %12 = vector.load %arg7[%c0_10, %c0_11] : memref<256x128xf32, #tpu.memory_space<vmem>>, vector<256x128xf32>
      %13 = arith.truncf %12 : vector<256x128xf32> to vector<256x128xbf16>
      %c0_12 = arith.constant 0 : index
      %c0_13 = arith.constant 0 : index
      %14 = vector.load %arg5[%c0_12, %c0_13] : memref<256x128xbf16, #tpu.memory_space<vmem>>, vector<256x128xbf16>
      tpu.vector_store %arg5[%c0_12, %c0_13], %13 {strides = array<i32>} : memref<256x128xbf16, #tpu.memory_space<vmem>>, vector<256x128xbf16>,
      %c0_14 = arith.constant 0 : index
      %c0_15 = arith.constant 0 : index
      %15 = vector.load %arg4[%c0_14, %c0_15] : memref<256x128xf32, #tpu.memory_space<vmem>>, vector<256x128xf32>
      %c0_16 = arith.constant 0 : index
      %c0_17 = arith.constant 0 : index
      %16 = vector.load %arg7[%c0_16, %c0_17] : memref<256x128xf32, #tpu.memory_space<vmem>>, vector<256x128xf32>
      %17 = arith.addf %15, %16 : vector<256x128xf32>
      %c0_18 = arith.constant 0 : index
      %c0_19 = arith.constant 0 : index
      %18 = vector.load %arg6[%c0_18, %c0_19] : memref<256x128xf32, #tpu.memory_space<vmem>>, vector<256x128xf32>
      tpu.vector_store %arg6[%c0_18, %c0_19], %17 {strides = array<i32>} : memref<256x128xf32, #tpu.memory_space<vmem>>, vector<256x128xf32>,
    } else {
    }
    return
  }
  func.func @transform_0(%arg0: i32, %arg1: i32) -> (i32, i32) {
    %c0_i32 = arith.constant 0 : i32
    return %arg0, %arg1 : i32, i32
  }
  func.func @transform_1(%arg0: i32, %arg1: i32) -> (i32, i32) {
    %c0_i32 = arith.constant 0 : i32
    %c0_i32_0 = arith.constant 0 : i32
    return %arg1, %c0_i32 : i32, i32
  }
  func.func @transform_2(%arg0: i32, %arg1: i32) -> (i32, i32) {
    %c0_i32 = arith.constant 0 : i32
    %c0_i32_0 = arith.constant 0 : i32
    return %arg0, %c0_i32 : i32, i32
  }
  func.func @transform_3(%arg0: i32, %arg1: i32) -> (i32, i32) {
    %c0_i32 = arith.constant 0 : i32
    %c0_i32_0 = arith.constant 0 : i32
    return %arg0, %c0_i32 : i32, i32
  }
  func.func @transform_4(%arg0: i32, %arg1: i32) -> (i32, i32) {
    %c0_i32 = arith.constant 0 : i32
    %c0_i32_0 = arith.constant 0 : i32
    return %arg0, %c0_i32 : i32, i32
  }
}

</mosaic_0001>

<llo_original>
// kernel: tpu_custom_call.1
$region0: #{tpu_custom_call.1}
  #allocation0 [shape = 'u32[]', space=smem, size = 0x4, offset = 0x4, fixed_abs, tag = 'smem constant byte address 0x4 - core index']
  #allocation1 [shape = 'u32[144,128]{1,0:T(1,128)}', space=vmem, size = 0x12000, scoped, tag = 'internal scratch']
  #allocation2 [shape = 'f32[256,128]{1,0:T(8,128)}', space=vmem, size = 0x20000, scoped, tag = 'scratch operand']
  %s0 = inlined_call_operand.hbm [shape: bf16[512,512], index: 0, kind: input, shape index: {}]
  %s1 = inlined_call_operand.hbm [shape: bf16[512,128], index: 1, kind: input, shape index: {}]
  %s2 = inlined_call_operand.hbm [shape: f32[512,128], index: 2, kind: input, shape index: {}]
  %s3 = inlined_call_operand.hbm [shape: bf16[512,128], index: 3, kind: output, shape index: {0}]
  %s4 = inlined_call_operand.hbm [shape: f32[512,128], index: 4, kind: output, shape index: {1}]
  %5 = xla_tuple %s3, %s4
  %s6 = sld [smem:[#allocation0]]
  $region73: #{tpu_custom_call.1} parent=0
    _
  %s8 = ssub.s32 1, %s6
  %s9 = scalar_select 0, %s8, %s6
  $region1: #{tpu_custom_call.1} parent=0
    #allocation3 [shape = 'u8[524288]{0}', space=vmem, size = 0x80000, scoped, tag = 'input window, operand 0']
    #allocation4 [shape = 's32[2]{0}', space=sflag, size = 0x8, scoped, tag = 'scoped memory for tpu_custom_call.1']
    #allocation5 [shape = 's32[2]{0}', space=sflag, size = 0x8, scoped, tag = 'scoped memory for tpu_custom_call.1']
    #allocation6 [shape = 'u8[131072]{0}', space=vmem, size = 0x20000, scoped, tag = 'input window, operand 1, single buffered']
    #allocation7 [shape = 's32[1]{0}', space=sflag, size = 0x4, scoped, tag = 'scoped memory for tpu_custom_call.1']
    #allocation8 [shape = 'u8[262144]{0}', space=vmem, size = 0x40000, scoped, tag = 'input window, operand 2']
    #allocation9 [shape = 'u8[131072]{0}', space=vmem, size = 0x20000, scoped, tag = 'output window, operand 0']
    #allocation10 [shape = 'u8[262144]{0}', space=vmem, size = 0x40000, scoped, tag = 'output window, operand 1']
    #allocation11 [shape = 's32[2]{0}', space=sflag, size = 0x8, scoped, tag = 'scoped memory for tpu_custom_call.1']
    %10 = vsyncpa [#allocation4], 0
    %s11 = scalar_lea.sflag [#allocation4], 1
    %12 = vsyncpa %s11, 0
    %13 = vsyncpa [#allocation7], 0
    %14 = vsyncpa [#allocation5], 0
    %s15 = scalar_lea.sflag [#allocation5], 1
    %16 = vsyncpa %s15, 0
    %17 = vsyncpa [#allocation11], 0
    %s18 = scalar_lea.sflag [#allocation11], 1
    %19 = vsyncpa %s18, 0
    loop: start=0, step=1, limit=4
    $region2: #{tpu_custom_call.1} parent=1 // loop_pre_header
      _
    $region3: #{tpu_custom_call.1} parent=1 // loop_header
      %s21 = sphi 0, %s25
      %p22 = scmp.ge.s32.totalorder %s21, 4
      %s28 = sphi 0, %s40
      %s29 = sphi 0, %s36
      %s30 = sphi 0, %s28
      %s31 = sphi 0, %s29
      %s32 = sphi 0, %s30
      %s33 = sphi 0, %s31
      %s45 = sphi 0, %s47
      %s48 = sphi 0, %s45
      %s49 = sphi 0, %s48
      %s65 = sphi 0, %s49
      %s71 = sphi 0, %s73
      %s74 = sphi 0, %s71
      %s75 = sphi 0, %s74
      %s91 = sphi 0, %s75
      %s97 = sphi 0, %s99
      %s100 = sphi 0, %s97
      %s101 = sphi 0, %s100
      %s117 = sphi 0, %s101
      %s123 = sphi 0, %s125
      %s126 = sphi 0, %s123
      %s127 = sphi 0, %s126
      %s143 = sphi 0, %s127
      %s149 = sphi 0, %s151
      %s152 = sphi 0, %s149
      %s153 = sphi 0, %s152
      %s169 = sphi 0, %s153
    $region4: #{tpu_custom_call.1} parent=1 // loop_header_branch
      %24 = sbr.rel (%p22) target = $region8
    $region5: #{tpu_custom_call.1} parent=1 // loop_body
      %s26 = ssub.s32 %s21, 1
      %s27 = ssub.s32 %s21, 2
      %s34 = sadd.s32 1, %s29
      %p35 = scmp.ge.s32.totalorder %s34, 1
      %s36 = scalar_select %p35, 0, %s34
      %s37 = sadd.s32 1, %s28
      %s38 = scalar_select %p35, %s37, %s28
      %p39 = scmp.ge.s32.totalorder %s38, 2
      %s40 = scalar_select %p39, 0, %s38
      %s41 = ssub.s32 %s28, %s40
      %s42 = ssub.s32 %s29, %s36
      %s43 = sor.u32 %s41, %s42
      %p44 = scmp.eq.s32.totalorder %s43, 0
      %s46 = sadd.s32 %s45, 1
      %s47 = scalar_select %p44, %s45, %s46
      %p50 = pneg %p44
      %p51 = scmp.eq.s32.totalorder %s21, 1
      %p52 = por %p50, %p51
      %p53 = scmp.ne.s32.totalorder %s45, %s48
      %p54 = scmp.eq.s32.totalorder %s21, 0
      %p55 = por %p53, %p54
      %p56 = scmp.ne.s32.totalorder %s45, %s48
      %p57 = scmp.eq.s32.totalorder %s26, 1
      %p58 = por %p56, %p57
      %p59 = scmp.ne.s32.totalorder %s48, %s49
      %p60 = scmp.eq.s32.totalorder %s26, 0
      %p61 = por %p59, %p60
      %p62 = scmp.ne.s32.totalorder %s48, %s49
      %p63 = scmp.eq.s32.totalorder %s27, 1
      %p64 = por %p62, %p63
      %p66 = scmp.ne.s32.totalorder %s49, %s65
      %p67 = scmp.eq.s32.totalorder %s27, 0
      %p68 = por %p66, %p67
      %s69 = ssub.s32 %s29, %s36
      %p70 = scmp.eq.s32.totalorder %s69, 0
      %s72 = sadd.s32 %s71, 1
      %s73 = scalar_select %p70, %s71, %s72
      %p76 = pneg %p70
      %p77 = scmp.eq.s32.totalorder %s21, 1
      %p78 = por %p76, %p77
      %p79 = scmp.ne.s32.totalorder %s71, %s74
      %p80 = scmp.eq.s32.totalorder %s21, 0
      %p81 = por %p79, %p80
      %p82 = scmp.ne.s32.totalorder %s71, %s74
      %p83 = scmp.eq.s32.totalorder %s26, 1
      %p84 = por %p82, %p83
      %p85 = scmp.ne.s32.totalorder %s74, %s75
      %p86 = scmp.eq.s32.totalorder %s26, 0
      %p87 = por %p85, %p86
      %p88 = scmp.ne.s32.totalorder %s74, %s75
      %p89 = scmp.eq.s32.totalorder %s27, 1
      %p90 = por %p88, %p89
      %p92 = scmp.ne.s32.totalorder %s75, %s91
      %p93 = scmp.eq.s32.totalorder %s27, 0
      %p94 = por %p92, %p93
      %s95 = ssub.s32 %s28, %s40
      %p96 = scmp.eq.s32.totalorder %s95, 0
      %s98 = sadd.s32 %s97, 1
      %s99 = scalar_select %p96, %s97, %s98
      %p102 = pneg %p96
      %p103 = scmp.eq.s32.totalorder %s21, 1
      %p104 = por %p102, %p103
      %p105 = scmp.ne.s32.totalorder %s97, %s100
      %p106 = scmp.eq.s32.totalorder %s21, 0
      %p107 = por %p105, %p106
      %p108 = scmp.ne.s32.totalorder %s97, %s100
      %p109 = scmp.eq.s32.totalorder %s26, 1
      %p110 = por %p108, %p109
      %p111 = scmp.ne.s32.totalorder %s100, %s101
      %p112 = scmp.eq.s32.totalorder %s26, 0
      %p113 = por %p111, %p112
      %p114 = scmp.ne.s32.totalorder %s100, %s101
      %p115 = scmp.eq.s32.totalorder %s27, 1
      %p116 = por %p114, %p115
      %p118 = scmp.ne.s32.totalorder %s101, %s117
      %p119 = scmp.eq.s32.totalorder %s27, 0
      %p120 = por %p118, %p119
      %s121 = ssub.s32 %s28, %s40
      %p122 = scmp.eq.s32.totalorder %s121, 0
      %s124 = sadd.s32 %s123, 1
      %s125 = scalar_select %p122, %s123, %s124
      %p128 = pneg %p122
      %p129 = scmp.eq.s32.totalorder %s21, 1
      %p130 = por %p128, %p129
      %p131 = scmp.ne.s32.totalorder %s123, %s126
      %p132 = scmp.eq.s32.totalorder %s21, 0
      %p133 = por %p131, %p132
      %p134 = scmp.ne.s32.totalorder %s123, %s126
      %p135 = scmp.eq.s32.totalorder %s26, 1
      %p136 = por %p134, %p135
      %p137 = scmp.ne.s32.totalorder %s126, %s127
      %p138 = scmp.eq.s32.totalorder %s26, 0
      %p139 = por %p137, %p138
      %p140 = scmp.ne.s32.totalorder %s126, %s127
      %p141 = scmp.eq.s32.totalorder %s27, 1
      %p142 = por %p140, %p141
      %p144 = scmp.ne.s32.totalorder %s127, %s143
      %p145 = scmp.eq.s32.totalorder %s27, 0
      %p146 = por %p144, %p145
      %s147 = ssub.s32 %s28, %s40
      %p148 = scmp.eq.s32.totalorder %s147, 0
      %s150 = sadd.s32 %s149, 1
      %s151 = scalar_select %p148, %s149, %s150
      %p154 = pneg %p148
      %p155 = scmp.eq.s32.totalorder %s21, 1
      %p156 = por %p154, %p155
      %p157 = scmp.ne.s32.totalorder %s149, %s152
      %p158 = scmp.eq.s32.totalorder %s21, 0
      %p159 = por %p157, %p158
      %p160 = scmp.ne.s32.totalorder %s149, %s152
      %p161 = scmp.eq.s32.totalorder %s26, 1
      %p162 = por %p160, %p161
      %p163 = scmp.ne.s32.totalorder %s152, %s153
      %p164 = scmp.eq.s32.totalorder %s26, 0
      %p165 = por %p163, %p164
      %p166 = scmp.ne.s32.totalorder %s152, %s153
      %p167 = scmp.eq.s32.totalorder %s27, 1
      %p168 = por %p166, %p167
      %p170 = scmp.ne.s32.totalorder %s153, %s169
      %p171 = scmp.eq.s32.totalorder %s27, 0
      %p172 = por %p170, %p171
      %p173 = scmp.le.s32.totalorder 1, %s21
      %p174 = scmp.lt.s32.totalorder %s21, 3
      %p175 = pnand %p173, %p174
      %p176 = pneg %p175
      // Predicated region
      $region9: #{tpu_custom_call.1} parent=5 // pred_check
        _
      $region10: #{tpu_custom_call.1} parent=5 // pred_check_branch
        %178 = sbr.rel (%p175) target = $region12
      $region11: #{tpu_custom_call.1} parent=5 // pred_region
        %s179 = ssub.s32 %s21, 1
        // Predicated region
        $region13: #{tpu_custom_call.1} parent=11 // pred_check
          %p180 = pneg %p87
        $region14: #{tpu_custom_call.1} parent=11 // pred_check_branch
          %182 = sbr.rel (%p180) target = $region16
        $region15: #{tpu_custom_call.1} parent=11 // pred_region
          %s183 = smul.u32 64, %s31
          %s185 = ssub.s32 4096, 4096
          %186 = vsyncadd [#allocation7], %s185
          %s187 = smul.addr %s183, 64
          %s188 = scalar_lea.hbm %s1, %s187
          %s189 = sshll.u32 [#allocation6], 4
          %s190 = int_to_ptr.vmem [resolvable:$true] %s189
          %195 = dma.hbm_to_vmem [thread:$0]  %s188, 4096, %s190, [#allocation7], 64, 64, 4
        $region16: #{tpu_custom_call.1} parent=11 // pred_fallthru
          _
      $region12: #{tpu_custom_call.1} parent=5 // pred_fallthru
        _
      %p196 = scmp.lt.s32.totalorder %s21, 2
      // Predicated region
      $region17: #{tpu_custom_call.1} parent=5 // pred_check
        %p197 = pneg %p196
      $region18: #{tpu_custom_call.1} parent=5 // pred_check_branch
        %199 = sbr.rel (%p197) target = $region20
      $region19: #{tpu_custom_call.1} parent=5 // pred_region
        // Predicated region
        $region21: #{tpu_custom_call.1} parent=19 // pred_check
          %p200 = pneg %p55
        $region22: #{tpu_custom_call.1} parent=19 // pred_check_branch
          %202 = sbr.rel (%p200) target = $region24
        $region23: #{tpu_custom_call.1} parent=19 // pred_region
          %s203 = sand.u32 %s21, 1
          %s204 = scalar_lea.sflag [#allocation4], %s203
          %s205 = sand.u32 %s45, 1
          %s206 = smul.addr %s205, 512
          %s207 = scalar_lea.vmem [#allocation3], %s206
          %s208 = smul.u32 32, %s28
          %s209 = smul.u32 4, %s29
          %s211 = ssub.s32 8192, 8192
          %212 = vsyncadd %s204, %s211
          %s213 = smul.addr %s208, 4
          %s214 = sadd.s32 %s209, %s213
          %s215 = smul.addr %s214, 64
          %s216 = scalar_lea.hbm %s0, %s215
          %s217 = sshll.u32 %s207, 4
          %s218 = int_to_ptr.vmem [resolvable:$true] %s217
          %223 = dma.hbm_to_vmem [thread:$0]  %s216, 8192, %s218, %s204, 256, 256, 16
        $region24: #{tpu_custom_call.1} parent=19 // pred_fallthru
          _
        // Predicated region
        $region25: #{tpu_custom_call.1} parent=19 // pred_check
          %p224 = pneg %p107
        $region26: #{tpu_custom_call.1} parent=19 // pred_check_branch
          %226 = sbr.rel (%p224) target = $region28
        $region27: #{tpu_custom_call.1} parent=19 // pred_region
          %s227 = sand.u32 %s21, 1
          %s228 = scalar_lea.sflag [#allocation4], %s227
          %s229 = sand.u32 %s97, 1
          %s230 = smul.addr %s229, 256
          %s231 = scalar_lea.vmem [#allocation8], %s230
          %s232 = smul.u32 32, %s28
          %s234 = ssub.s32 4096, 4096
          %235 = vsyncadd %s228, %s234
          %s236 = smul.addr %s232, 128
          %s237 = scalar_lea.hbm %s2, %s236
          %s238 = sshll.u32 %s231, 4
          %s239 = int_to_ptr.vmem [resolvable:$true] %s238
          %244 = dma.hbm_to_vmem [thread:$0]  %s237, 4096, %s239, %s228, 128, 128, 8
        $region28: #{tpu_custom_call.1} parent=19 // pred_fallthru
          _
      $region20: #{tpu_custom_call.1} parent=5 // pred_fallthru
        _
      %p245 = scmp.le.s32.totalorder 1, %s21
      %p246 = scmp.lt.s32.totalorder %s21, 3
      %p247 = pnand %p245, %p246
      %p248 = pneg %p247
      // Predicated region
      $region29: #{tpu_custom_call.1} parent=5 // pred_check
        _
      $region30: #{tpu_custom_call.1} parent=5 // pred_check_branch
        %250 = sbr.rel (%p247) target = $region32
      $region31: #{tpu_custom_call.1} parent=5 // pred_region
        %s251 = ssub.s32 %s21, 1
        %s252 = sand.u32 %s26, 1
        %s253 = scalar_lea.sflag [#allocation4], %s252
        %s254 = sand.u32 %s48, 1
        %s255 = smul.addr %s254, 512
        %s256 = scalar_lea.vmem [#allocation3], %s255
        // Predicated region
        $region33: #{tpu_custom_call.1} parent=31 // pred_check
          %p257 = pneg %p61
        $region34: #{tpu_custom_call.1} parent=31 // pred_check_branch
          %259 = sbr.rel (%p257) target = $region36
        $region35: #{tpu_custom_call.1} parent=31 // pred_region
          %260 = dma.done %s253, 8192
        $region36: #{tpu_custom_call.1} parent=31 // pred_fallthru
          _
        // Predicated region
        $region37: #{tpu_custom_call.1} parent=31 // pred_check
          %p261 = pneg %p87
        $region38: #{tpu_custom_call.1} parent=31 // pred_check_branch
          %263 = sbr.rel (%p261) target = $region40
        $region39: #{tpu_custom_call.1} parent=31 // pred_region
          %264 = dma.done [#allocation7], 4096
        $region40: #{tpu_custom_call.1} parent=31 // pred_fallthru
          _
        %s265 = sand.u32 %s26, 1
        %s266 = scalar_lea.sflag [#allocation4], %s265
        %s267 = sand.u32 %s100, 1
        %s268 = smul.addr %s267, 256
        %s269 = scalar_lea.vmem [#allocation8], %s268
        // Predicated region
        $region41: #{tpu_custom_call.1} parent=31 // pred_check
          %p270 = pneg %p113
        $region42: #{tpu_custom_call.1} parent=31 // pred_check_branch
          %272 = sbr.rel (%p270) target = $region44
        $region43: #{tpu_custom_call.1} parent=31 // pred_region
          %273 = dma.done %s266, 4096
        $region44: #{tpu_custom_call.1} parent=31 // pred_fallthru
          _
        %s274 = sand.u32 %s26, 1
        %s275 = scalar_lea.sflag [#allocation4], %s274
        %s276 = sand.u32 %s48, 1
        %s277 = smul.addr %s276, 512
        %s278 = scalar_lea.vmem [#allocation3], %s277
        %p279 = pneg %p61
        %p280 = pneg %p58
        %p281 = pneg %p87
        %p282 = pneg %p84
        %s283 = sand.u32 %s26, 1
        %s284 = scalar_lea.sflag [#allocation4], %s283
        %s285 = sand.u32 %s100, 1
        %s286 = smul.addr %s285, 256
        %s287 = scalar_lea.vmem [#allocation8], %s286
        %p288 = pneg %p113
        %p289 = pneg %p110
        %p290 = pneg %p139
        %p291 = pneg %p136
        %s292 = sand.u32 %s126, 1
        %s293 = scalar_lea.sflag [#allocation5], %s292
        %s294 = sand.u32 %s126, 1
        %s295 = smul.addr %s294, 128
        %s296 = scalar_lea.vmem [#allocation9], %s295
        %p297 = pneg %p165
        %p298 = pneg %p162
        %s299 = sand.u32 %s152, 1
        %s300 = scalar_lea.sflag [#allocation11], %s299
        %s301 = sand.u32 %s152, 1
        %s302 = smul.addr %s301, 256
        %s303 = scalar_lea.vmem [#allocation10], %s302
        %s304 = smul.u32 32, %s30
        %s305 = smul.u32 4, %s31
        %s306 = smul.u32 64, %s31
        %s307 = smul.u32 32, %s30
        %s308 = smul.u32 32, %s30
        %s309 = smul.u32 32, %s30
        %p311 = scmp.eq.s32.totalorder %s31, 0
        // Predicated region
        $region45: #{tpu_custom_call.1} parent=31 // pred_check
          %p312 = pneg %p311
        $region46: #{tpu_custom_call.1} parent=31 // pred_check_branch
          %314 = sbr.rel (%p312) target = $region48
        $region47: #{tpu_custom_call.1} parent=31 // pred_region
          %315 = vst [vmem:[#allocation2] sm:$0xff] 0.0
          %316 = vst [vmem:[#allocation2 + $0x8] sm:$0xff] 0.0
          %317 = vst [vmem:[#allocation2 + $0x10] sm:$0xff] 0.0
          %318 = vst [vmem:[#allocation2 + $0x18] sm:$0xff] 0.0
          %319 = vst [vmem:[#allocation2 + $0x20] sm:$0xff] 0.0
          %320 = vst [vmem:[#allocation2 + $0x28] sm:$0xff] 0.0
          %321 = vst [vmem:[#allocation2 + $0x30] sm:$0xff] 0.0
          %322 = vst [vmem:[#allocation2 + $0x38] sm:$0xff] 0.0
          %323 = vst [vmem:[#allocation2 + $0x40] sm:$0xff] 0.0
          %324 = vst [vmem:[#allocation2 + $0x48] sm:$0xff] 0.0
          %325 = vst [vmem:[#allocation2 + $0x50] sm:$0xff] 0.0
          %326 = vst [vmem:[#allocation2 + $0x58] sm:$0xff] 0.0
          %327 = vst [vmem:[#allocation2 + $0x60] sm:$0xff] 0.0
          %328 = vst [vmem:[#allocation2 + $0x68] sm:$0xff] 0.0
          %329 = vst [vmem:[#allocation2 + $0x70] sm:$0xff] 0.0
          %330 = vst [vmem:[#allocation2 + $0x78] sm:$0xff] 0.0
          %331 = vst [vmem:[#allocation2 + $0x80] sm:$0xff] 0.0
          %332 = vst [vmem:[#allocation2 + $0x88] sm:$0xff] 0.0
          %333 = vst [vmem:[#allocation2 + $0x90] sm:$0xff] 0.0
          %334 = vst [vmem:[#allocation2 + $0x98] sm:$0xff] 0.0
          %335 = vst [vmem:[#allocation2 + $0xa0] sm:$0xff] 0.0
          %336 = vst [vmem:[#allocation2 + $0xa8] sm:$0xff] 0.0
          %337 = vst [vmem:[#allocation2 + $0xb0] sm:$0xff] 0.0
          %338 = vst [vmem:[#allocation2 + $0xb8] sm:$0xff] 0.0
          %339 = vst [vmem:[#allocation2 + $0xc0] sm:$0xff] 0.0
          %340 = vst [vmem:[#allocation2 + $0xc8] sm:$0xff] 0.0
          %341 = vst [vmem:[#allocation2 + $0xd0] sm:$0xff] 0.0
          %342 = vst [vmem:[#allocation2 + $0xd8] sm:$0xff] 0.0
          %343 = vst [vmem:[#allocation2 + $0xe0] sm:$0xff] 0.0
          %344 = vst [vmem:[#allocation2 + $0xe8] sm:$0xff] 0.0
          %345 = vst [vmem:[#allocation2 + $0xf0] sm:$0xff] 0.0
          %346 = vst [vmem:[#allocation2 + $0xf8] sm:$0xff] 0.0
        $region48: #{tpu_custom_call.1} parent=31 // pred_fallthru
          _
        %v347 = vld [vmem:[#allocation2] sm:$0xff]
        %v348 = vld [vmem:[#allocation2 + $0x8] sm:$0xff]
        %v349 = vld [vmem:[#allocation2 + $0x10] sm:$0xff]
        %v350 = vld [vmem:[#allocation2 + $0x18] sm:$0xff]
        %v351 = vld [vmem:[#allocation2 + $0x20] sm:$0xff]
        %v352 = vld [vmem:[#allocation2 + $0x28] sm:$0xff]
        %v353 = vld [vmem:[#allocation2 + $0x30] sm:$0xff]
        %v354 = vld [vmem:[#allocation2 + $0x38] sm:$0xff]
        %v355 = vld [vmem:[#allocation2 + $0x40] sm:$0xff]
        %v356 = vld [vmem:[#allocation2 + $0x48] sm:$0xff]
        %v357 = vld [vmem:[#allocation2 + $0x50] sm:$0xff]
        %v358 = vld [vmem:[#allocation2 + $0x58] sm:$0xff]
        %v359 = vld [vmem:[#allocation2 + $0x60] sm:$0xff]
        %v360 = vld [vmem:[#allocation2 + $0x68] sm:$0xff]
        %v361 = vld [vmem:[#allocation2 + $0x70] sm:$0xff]
        %v362 = vld [vmem:[#allocation2 + $0x78] sm:$0xff]
        %v363 = vld [vmem:[#allocation2 + $0x80] sm:$0xff]
        %v364 = vld [vmem:[#allocation2 + $0x88] sm:$0xff]
        %v365 = vld [vmem:[#allocation2 + $0x90] sm:$0xff]
        %v366 = vld [vmem:[#allocation2 + $0x98] sm:$0xff]
        %v367 = vld [vmem:[#allocation2 + $0xa0] sm:$0xff]
        %v368 = vld [vmem:[#allocation2 + $0xa8] sm:$0xff]
        %v369 = vld [vmem:[#allocation2 + $0xb0] sm:$0xff]
        %v370 = vld [vmem:[#allocation2 + $0xb8] sm:$0xff]
        %v371 = vld [vmem:[#allocation2 + $0xc0] sm:$0xff]
        %v372 = vld [vmem:[#allocation2 + $0xc8] sm:$0xff]
        %v373 = vld [vmem:[#allocation2 + $0xd0] sm:$0xff]
        %v374 = vld [vmem:[#allocation2 + $0xd8] sm:$0xff]
        %v375 = vld [vmem:[#allocation2 + $0xe0] sm:$0xff]
        %v376 = vld [vmem:[#allocation2 + $0xe8] sm:$0xff]
        %v377 = vld [vmem:[#allocation2 + $0xf0] sm:$0xff]
        %v378 = vld [vmem:[#allocation2 + $0xf8] sm:$0xff]
        %v379 = vld [vmem:[%s256] sm:$0xff]
        %v380 = vld [vmem:[%s256 + $0x8] sm:$0xff]
        %v381 = vld [vmem:[%s256 + $0x10] sm:$0xff]
        %v382 = vld [vmem:[%s256 + $0x18] sm:$0xff]
        %v383 = vld [vmem:[%s256 + $0x20] sm:$0xff]
        %v384 = vld [vmem:[%s256 + $0x28] sm:$0xff]
        %v385 = vld [vmem:[%s256 + $0x30] sm:$0xff]
        %v386 = vld [vmem:[%s256 + $0x38] sm:$0xff]
        %v387 = vld [vmem:[%s256 + $0x40] sm:$0xff]
        %v388 = vld [vmem:[%s256 + $0x48] sm:$0xff]
        %v389 = vld [vmem:[%s256 + $0x50] sm:$0xff]
        %v390 = vld [vmem:[%s256 + $0x58] sm:$0xff]
        %v391 = vld [vmem:[%s256 + $0x60] sm:$0xff]
        %v392 = vld [vmem:[%s256 + $0x68] sm:$0xff]
        %v393 = vld [vmem:[%s256 + $0x70] sm:$0xff]
        %v394 = vld [vmem:[%s256 + $0x78] sm:$0xff]
        %v395 = vld [vmem:[%s256 + $0x80] sm:$0xff]
        %v396 = vld [vmem:[%s256 + $0x88] sm:$0xff]
        %v397 = vld [vmem:[%s256 + $0x90] sm:$0xff]
        %v398 = vld [vmem:[%s256 + $0x98] sm:$0xff]
        %v399 = vld [vmem:[%s256 + $0xa0] sm:$0xff]
        %v400 = vld [vmem:[%s256 + $0xa8] sm:$0xff]
        %v401 = vld [vmem:[%s256 + $0xb0] sm:$0xff]
        %v402 = vld [vmem:[%s256 + $0xb8] sm:$0xff]
        %v403 = vld [vmem:[%s256 + $0xc0] sm:$0xff]
        %v404 = vld [vmem:[%s256 + $0xc8] sm:$0xff]
        %v405 = vld [vmem:[%s256 + $0xd0] sm:$0xff]
        %v406 = vld [vmem:[%s256 + $0xd8] sm:$0xff]
        %v407 = vld [vmem:[%s256 + $0xe0] sm:$0xff]
        %v408 = vld [vmem:[%s256 + $0xe8] sm:$0xff]
        %v409 = vld [vmem:[%s256 + $0xf0] sm:$0xff]
        %v410 = vld [vmem:[%s256 + $0xf8] sm:$0xff]
        %v411 = vld [vmem:[%s256 + $0x100] sm:$0xff]
        %v412 = vld [vmem:[%s256 + $0x108] sm:$0xff]
        %v413 = vld [vmem:[%s256 + $0x110] sm:$0xff]
        %v414 = vld [vmem:[%s256 + $0x118] sm:$0xff]
        %v415 = vld [vmem:[%s256 + $0x120] sm:$0xff]
        %v416 = vld [vmem:[%s256 + $0x128] sm:$0xff]
        %v417 = vld [vmem:[%s256 + $0x130] sm:$0xff]
        %v418 = vld [vmem:[%s256 + $0x138] sm:$0xff]
        %v419 = vld [vmem:[%s256 + $0x140] sm:$0xff]
        %v420 = vld [vmem:[%s256 + $0x148] sm:$0xff]
        %v421 = vld [vmem:[%s256 + $0x150] sm:$0xff]
        %v422 = vld [vmem:[%s256 + $0x158] sm:$0xff]
        %v423 = vld [vmem:[%s256 + $0x160] sm:$0xff]
        %v424 = vld [vmem:[%s256 + $0x168] sm:$0xff]
        %v425 = vld [vmem:[%s256 + $0x170] sm:$0xff]
        %v426 = vld [vmem:[%s256 + $0x178] sm:$0xff]
        %v427 = vld [vmem:[%s256 + $0x180] sm:$0xff]
        %v428 = vld [vmem:[%s256 + $0x188] sm:$0xff]
        %v429 = vld [vmem:[%s256 + $0x190] sm:$0xff]
        %v430 = vld [vmem:[%s256 + $0x198] sm:$0xff]
        %v431 = vld [vmem:[%s256 + $0x1a0] sm:$0xff]
        %v432 = vld [vmem:[%s256 + $0x1a8] sm:$0xff]
        %v433 = vld [vmem:[%s256 + $0x1b0] sm:$0xff]
        %v434 = vld [vmem:[%s256 + $0x1b8] sm:$0xff]
        %v435 = vld [vmem:[%s256 + $0x1c0] sm:$0xff]
        %v436 = vld [vmem:[%s256 + $0x1c8] sm:$0xff]
        %v437 = vld [vmem:[%s256 + $0x1d0] sm:$0xff]
        %v438 = vld [vmem:[%s256 + $0x1d8] sm:$0xff]
        %v439 = vld [vmem:[%s256 + $0x1e0] sm:$0xff]
        %v440 = vld [vmem:[%s256 + $0x1e8] sm:$0xff]
        %v441 = vld [vmem:[%s256 + $0x1f0] sm:$0xff]
        %v442 = vld [vmem:[%s256 + $0x1f8] sm:$0xff]
        %v443 = vld [vmem:[#allocation6] sm:$0xf]
        %v444 = vld [vmem:[#allocation6 + $0x4] sm:$0xf]
        %v445 = vld [vmem:[#allocation6 + $0x8] sm:$0xf]
        %v446 = vld [vmem:[#allocation6 + $0xc] sm:$0xf]
        %v447 = vld [vmem:[#allocation6 + $0x10] sm:$0xf]
        %v448 = vld [vmem:[#allocation6 + $0x14] sm:$0xf]
        %v449 = vld [vmem:[#allocation6 + $0x18] sm:$0xf]
        %v450 = vld [vmem:[#allocation6 + $0x1c] sm:$0xf]
        %v451 = vld [vmem:[#allocation6 + $0x20] sm:$0xf]
        %v452 = vld [vmem:[#allocation6 + $0x24] sm:$0xf]
        %v453 = vld [vmem:[#allocation6 + $0x28] sm:$0xf]
        %v454 = vld [vmem:[#allocation6 + $0x2c] sm:$0xf]
        %v455 = vld [vmem:[#allocation6 + $0x30] sm:$0xf]
        %v456 = vld [vmem:[#allocation6 + $0x34] sm:$0xf]
        %v457 = vld [vmem:[#allocation6 + $0x38] sm:$0xf]
        %v458 = vld [vmem:[#allocation6 + $0x3c] sm:$0xf]
        %v459 = vld [vmem:[#allocation6 + $0x40] sm:$0xf]
        %v460 = vld [vmem:[#allocation6 + $0x44] sm:$0xf]
        %v461 = vld [vmem:[#allocation6 + $0x48] sm:$0xf]
        %v462 = vld [vmem:[#allocation6 + $0x4c] sm:$0xf]
        %v463 = vld [vmem:[#allocation6 + $0x50] sm:$0xf]
        %v464 = vld [vmem:[#allocation6 + $0x54] sm:$0xf]
        %v465 = vld [vmem:[#allocation6 + $0x58] sm:$0xf]
        %v466 = vld [vmem:[#allocation6 + $0x5c] sm:$0xf]
        %v467 = vld [vmem:[#allocation6 + $0x60] sm:$0xf]
        %v468 = vld [vmem:[#allocation6 + $0x64] sm:$0xf]
        %v469 = vld [vmem:[#allocation6 + $0x68] sm:$0xf]
        %v470 = vld [vmem:[#allocation6 + $0x6c] sm:$0xf]
        %v471 = vld [vmem:[#allocation6 + $0x70] sm:$0xf]
        %v472 = vld [vmem:[#allocation6 + $0x74] sm:$0xf]
        %v473 = vld [vmem:[#allocation6 + $0x78] sm:$0xf]
        %v474 = vld [vmem:[#allocation6 + $0x7c] sm:$0xf]
        %v475 = vld [vmem:[#allocation6 + $0x80] sm:$0xf]
        %v476 = vld [vmem:[#allocation6 + $0x84] sm:$0xf]
        %v477 = vld [vmem:[#allocation6 + $0x88] sm:$0xf]
        %v478 = vld [vmem:[#allocation6 + $0x8c] sm:$0xf]
        %v479 = vld [vmem:[#allocation6 + $0x90] sm:$0xf]
        %v480 = vld [vmem:[#allocation6 + $0x94] sm:$0xf]
        %v481 = vld [vmem:[#allocation6 + $0x98] sm:$0xf]
        %v482 = vld [vmem:[#allocation6 + $0x9c] sm:$0xf]
        %v483 = vld [vmem:[#allocation6 + $0xa0] sm:$0xf]
        %v484 = vld [vmem:[#allocation6 + $0xa4] sm:$0xf]
        %v485 = vld [vmem:[#allocation6 + $0xa8] sm:$0xf]
        %v486 = vld [vmem:[#allocation6 + $0xac] sm:$0xf]
        %v487 = vld [vmem:[#allocation6 + $0xb0] sm:$0xf]
        %v488 = vld [vmem:[#allocation6 + $0xb4] sm:$0xf]
        %v489 = vld [vmem:[#allocation6 + $0xb8] sm:$0xf]
        %v490 = vld [vmem:[#allocation6 + $0xbc] sm:$0xf]
        %v491 = vld [vmem:[#allocation6 + $0xc0] sm:$0xf]
        %v492 = vld [vmem:[#allocation6 + $0xc4] sm:$0xf]
        %v493 = vld [vmem:[#allocation6 + $0xc8] sm:$0xf]
        %v494 = vld [vmem:[#allocation6 + $0xcc] sm:$0xf]
        %v495 = vld [vmem:[#allocation6 + $0xd0] sm:$0xf]
        %v496 = vld [vmem:[#allocation6 + $0xd4] sm:$0xf]
        %v497 = vld [vmem:[#allocation6 + $0xd8] sm:$0xf]
        %v498 = vld [vmem:[#allocation6 + $0xdc] sm:$0xf]
        %v499 = vld [vmem:[#allocation6 + $0xe0] sm:$0xf]
        %v500 = vld [vmem:[#allocation6 + $0xe4] sm:$0xf]
        %v501 = vld [vmem:[#allocation6 + $0xe8] sm:$0xf]
        %v502 = vld [vmem:[#allocation6 + $0xec] sm:$0xf]
        %v503 = vld [vmem:[#allocation6 + $0xf0] sm:$0xf]
        %v504 = vld [vmem:[#allocation6 + $0xf4] sm:$0xf]
        %v505 = vld [vmem:[#allocation6 + $0xf8] sm:$0xf]
        %v506 = vld [vmem:[#allocation6 + $0xfc] sm:$0xf]
        %v571 = vunpack.c.l.b16 %v379
        %v572 = vunpack.c.h.b16 %v379
        %v573 = vunpack.c.l.b16 %v380
        %v574 = vunpack.c.h.b16 %v380
        %v575 = vunpack.c.l.b16 %v381
        %v576 = vunpack.c.h.b16 %v381
        %v577 = vunpack.c.l.b16 %v382
        %v578 = vunpack.c.h.b16 %v382
        %v579 = vunpack.c.l.b16 %v383
        %v580 = vunpack.c.h.b16 %v383
        %v581 = vunpack.c.l.b16 %v384
        %v582 = vunpack.c.h.b16 %v384
        %v583 = vunpack.c.l.b16 %v385
        %v584 = vunpack.c.h.b16 %v385
        %v585 = vunpack.c.l.b16 %v386
        %v586 = vunpack.c.h.b16 %v386
        %v587 = vunpack.c.l.b16 %v387
        %v588 = vunpack.c.h.b16 %v387
        %v589 = vunpack.c.l.b16 %v388
        %v590 = vunpack.c.h.b16 %v388
        %v591 = vunpack.c.l.b16 %v389
        %v592 = vunpack.c.h.b16 %v389
        %v593 = vunpack.c.l.b16 %v390
        %v594 = vunpack.c.h.b16 %v390
        %v595 = vunpack.c.l.b16 %v391
        %v596 = vunpack.c.h.b16 %v391
        %v597 = vunpack.c.l.b16 %v392
        %v598 = vunpack.c.h.b16 %v392
        %v599 = vunpack.c.l.b16 %v393
        %v600 = vunpack.c.h.b16 %v393
        %v601 = vunpack.c.l.b16 %v394
        %v602 = vunpack.c.h.b16 %v394
        %v603 = vunpack.c.l.b16 %v395
        %v604 = vunpack.c.h.b16 %v395
        %v605 = vunpack.c.l.b16 %v396
        %v606 = vunpack.c.h.b16 %v396
        %v607 = vunpack.c.l.b16 %v397
        %v608 = vunpack.c.h.b16 %v397
        %v609 = vunpack.c.l.b16 %v398
        %v610 = vunpack.c.h.b16 %v398
        %v611 = vunpack.c.l.b16 %v399
        %v612 = vunpack.c.h.b16 %v399
        %v613 = vunpack.c.l.b16 %v400
        %v614 = vunpack.c.h.b16 %v400
        %v615 = vunpack.c.l.b16 %v401
        %v616 = vunpack.c.h.b16 %v401
        %v617 = vunpack.c.l.b16 %v402
        %v618 = vunpack.c.h.b16 %v402
        %v619 = vunpack.c.l.b16 %v403
        %v620 = vunpack.c.h.b16 %v403
        %v621 = vunpack.c.l.b16 %v404
        %v622 = vunpack.c.h.b16 %v404
        %v623 = vunpack.c.l.b16 %v405
        %v624 = vunpack.c.h.b16 %v405
        %v625 = vunpack.c.l.b16 %v406
        %v626 = vunpack.c.h.b16 %v406
        %v627 = vunpack.c.l.b16 %v407
        %v628 = vunpack.c.h.b16 %v407
        %v629 = vunpack.c.l.b16 %v408
        %v630 = vunpack.c.h.b16 %v408
        %v631 = vunpack.c.l.b16 %v409
        %v632 = vunpack.c.h.b16 %v409
        %v633 = vunpack.c.l.b16 %v410
        %v634 = vunpack.c.h.b16 %v410
        %v635 = vunpack.c.l.b16 %v411
        %v636 = vunpack.c.h.b16 %v411
        %v637 = vunpack.c.l.b16 %v412
        %v638 = vunpack.c.h.b16 %v412
        %v639 = vunpack.c.l.b16 %v413
        %v640 = vunpack.c.h.b16 %v413
        %v641 = vunpack.c.l.b16 %v414
        %v642 = vunpack.c.h.b16 %v414
        %v643 = vunpack.c.l.b16 %v415
        %v644 = vunpack.c.h.b16 %v415
        %v645 = vunpack.c.l.b16 %v416
        %v646 = vunpack.c.h.b16 %v416
        %v647 = vunpack.c.l.b16 %v417
        %v648 = vunpack.c.h.b16 %v417
        %v649 = vunpack.c.l.b16 %v418
        %v650 = vunpack.c.h.b16 %v418
        %v651 = vunpack.c.l.b16 %v419
        %v652 = vunpack.c.h.b16 %v419
        %v653 = vunpack.c.l.b16 %v420
        %v654 = vunpack.c.h.b16 %v420
        %v655 = vunpack.c.l.b16 %v421
        %v656 = vunpack.c.h.b16 %v421
        %v657 = vunpack.c.l.b16 %v422
        %v658 = vunpack.c.h.b16 %v422
        %v659 = vunpack.c.l.b16 %v423
        %v660 = vunpack.c.h.b16 %v423
        %v661 = vunpack.c.l.b16 %v424
        %v662 = vunpack.c.h.b16 %v424
        %v663 = vunpack.c.l.b16 %v425
        %v664 = vunpack.c.h.b16 %v425
        %v665 = vunpack.c.l.b16 %v426
        %v666 = vunpack.c.h.b16 %v426
        %v667 = vunpack.c.l.b16 %v427
        %v668 = vunpack.c.h.b16 %v427
        %v669 = vunpack.c.l.b16 %v428
        %v670 = vunpack.c.h.b16 %v428
        %v671 = vunpack.c.l.b16 %v429
        %v672 = vunpack.c.h.b16 %v429
        %v673 = vunpack.c.l.b16 %v430
        %v674 = vunpack.c.h.b16 %v430
        %v675 = vunpack.c.l.b16 %v431
        %v676 = vunpack.c.h.b16 %v431
        %v677 = vunpack.c.l.b16 %v432
        %v678 = vunpack.c.h.b16 %v432
        %v679 = vunpack.c.l.b16 %v433
        %v680 = vunpack.c.h.b16 %v433
        %v681 = vunpack.c.l.b16 %v434
        %v682 = vunpack.c.h.b16 %v434
        %v683 = vunpack.c.l.b16 %v435
        %v684 = vunpack.c.h.b16 %v435
        %v685 = vunpack.c.l.b16 %v436
        %v686 = vunpack.c.h.b16 %v436
        %v687 = vunpack.c.l.b16 %v437
        %v688 = vunpack.c.h.b16 %v437
        %v689 = vunpack.c.l.b16 %v438
        %v690 = vunpack.c.h.b16 %v438
        %v691 = vunpack.c.l.b16 %v439
        %v692 = vunpack.c.h.b16 %v439
        %v693 = vunpack.c.l.b16 %v440
        %v694 = vunpack.c.h.b16 %v440
        %v695 = vunpack.c.l.b16 %v441
        %v696 = vunpack.c.h.b16 %v441
        %v697 = vunpack.c.l.b16 %v442
        %v698 = vunpack.c.h.b16 %v442
        %v699 = vpack.c.b16 %v575, %v571
        %v700 = vpack.c.b16 %v576, %v572
        %v701 = vpack.c.b16 %v577, %v573
        %v702 = vpack.c.b16 %v578, %v574
        %v703 = vpack.c.b16 %v583, %v579
        %v704 = vpack.c.b16 %v584, %v580
        %v705 = vpack.c.b16 %v585, %v581
        %v706 = vpack.c.b16 %v586, %v582
        %v707 = vpack.c.b16 %v591, %v587
        %v708 = vpack.c.b16 %v592, %v588
        %v709 = vpack.c.b16 %v593, %v589
        %v710 = vpack.c.b16 %v594, %v590
        %v711 = vpack.c.b16 %v599, %v595
        %v712 = vpack.c.b16 %v600, %v596
        %v713 = vpack.c.b16 %v601, %v597
        %v714 = vpack.c.b16 %v602, %v598
        %v715 = vpack.c.b16 %v607, %v603
        %v716 = vpack.c.b16 %v608, %v604
        %v717 = vpack.c.b16 %v609, %v605
        %v718 = vpack.c.b16 %v610, %v606
        %v719 = vpack.c.b16 %v615, %v611
        %v720 = vpack.c.b16 %v616, %v612
        %v721 = vpack.c.b16 %v617, %v613
        %v722 = vpack.c.b16 %v618, %v614
        %v723 = vpack.c.b16 %v623, %v619
        %v724 = vpack.c.b16 %v624, %v620
        %v725 = vpack.c.b16 %v625, %v621
        %v726 = vpack.c.b16 %v626, %v622
        %v727 = vpack.c.b16 %v631, %v627
        %v728 = vpack.c.b16 %v632, %v628
        %v729 = vpack.c.b16 %v633, %v629
        %v730 = vpack.c.b16 %v634, %v630
        %v731 = vpack.c.b16 %v639, %v635
        %v732 = vpack.c.b16 %v640, %v636
        %v733 = vpack.c.b16 %v641, %v637
        %v734 = vpack.c.b16 %v642, %v638
        %v735 = vpack.c.b16 %v647, %v643
        %v736 = vpack.c.b16 %v648, %v644
        %v737 = vpack.c.b16 %v649, %v645
        %v738 = vpack.c.b16 %v650, %v646
        %v739 = vpack.c.b16 %v655, %v651
        %v740 = vpack.c.b16 %v656, %v652
        %v741 = vpack.c.b16 %v657, %v653
        %v742 = vpack.c.b16 %v658, %v654
        %v743 = vpack.c.b16 %v663, %v659
        %v744 = vpack.c.b16 %v664, %v660
        %v745 = vpack.c.b16 %v665, %v661
        %v746 = vpack.c.b16 %v666, %v662
        %v747 = vpack.c.b16 %v671, %v667
        %v748 = vpack.c.b16 %v672, %v668
        %v749 = vpack.c.b16 %v673, %v669
        %v750 = vpack.c.b16 %v674, %v670
        %v751 = vpack.c.b16 %v679, %v675
        %v752 = vpack.c.b16 %v680, %v676
        %v753 = vpack.c.b16 %v681, %v677
        %v754 = vpack.c.b16 %v682, %v678
        %v755 = vpack.c.b16 %v687, %v683
        %v756 = vpack.c.b16 %v688, %v684
        %v757 = vpack.c.b16 %v689, %v685
        %v758 = vpack.c.b16 %v690, %v686
        %v759 = vpack.c.b16 %v695, %v691
        %v760 = vpack.c.b16 %v696, %v692
        %v761 = vpack.c.b16 %v697, %v693
        %v762 = vpack.c.b16 %v698, %v694
        %v891 = vunpack.c.l.b16 %v443
        %v892 = vunpack.c.l.b16 %v444
        %v893 = vunpack.c.l.b16 %v445
        %v894 = vunpack.c.l.b16 %v446
        %v895 = vunpack.c.l.b16 %v447
        %v896 = vunpack.c.l.b16 %v448
        %v897 = vunpack.c.l.b16 %v449
        %v898 = vunpack.c.l.b16 %v450
        %v899 = vunpack.c.l.b16 %v451
        %v900 = vunpack.c.l.b16 %v452
        %v901 = vunpack.c.l.b16 %v453
        %v902 = vunpack.c.l.b16 %v454
        %v903 = vunpack.c.l.b16 %v455
        %v904 = vunpack.c.l.b16 %v456
        %v905 = vunpack.c.l.b16 %v457
        %v906 = vunpack.c.l.b16 %v458
        %v907 = vunpack.c.l.b16 %v459
        %v908 = vunpack.c.l.b16 %v460
        %v909 = vunpack.c.l.b16 %v461
        %v910 = vunpack.c.l.b16 %v462
        %v911 = vunpack.c.l.b16 %v463
        %v912 = vunpack.c.l.b16 %v464
        %v913 = vunpack.c.l.b16 %v465
        %v914 = vunpack.c.l.b16 %v466
        %v915 = vunpack.c.l.b16 %v467
        %v916 = vunpack.c.l.b16 %v468
        %v917 = vunpack.c.l.b16 %v469
        %v918 = vunpack.c.l.b16 %v470
        %v919 = vunpack.c.l.b16 %v471
        %v920 = vunpack.c.l.b16 %v472
        %v921 = vunpack.c.l.b16 %v473
        %v922 = vunpack.c.l.b16 %v474
        %v923 = vunpack.c.l.b16 %v475
        %v924 = vunpack.c.l.b16 %v476
        %v925 = vunpack.c.l.b16 %v477
        %v926 = vunpack.c.l.b16 %v478
        %v927 = vunpack.c.l.b16 %v479
        %v928 = vunpack.c.l.b16 %v480
        %v929 = vunpack.c.l.b16 %v481
        %v930 = vunpack.c.l.b16 %v482
        %v931 = vunpack.c.l.b16 %v483
        %v932 = vunpack.c.l.b16 %v484
        %v933 = vunpack.c.l.b16 %v485
        %v934 = vunpack.c.l.b16 %v486
        %v935 = vunpack.c.l.b16 %v487
        %v936 = vunpack.c.l.b16 %v488
        %v937 = vunpack.c.l.b16 %v489
        %v938 = vunpack.c.l.b16 %v490
        %v939 = vunpack.c.l.b16 %v491
        %v940 = vunpack.c.l.b16 %v492
        %v941 = vunpack.c.l.b16 %v493
        %v942 = vunpack.c.l.b16 %v494
        %v943 = vunpack.c.l.b16 %v495
        %v944 = vunpack.c.l.b16 %v496
        %v945 = vunpack.c.l.b16 %v497
        %v946 = vunpack.c.l.b16 %v498
        %v947 = vunpack.c.l.b16 %v499
        %v948 = vunpack.c.l.b16 %v500
        %v949 = vunpack.c.l.b16 %v501
        %v950 = vunpack.c.l.b16 %v502
        %v951 = vunpack.c.l.b16 %v503
        %v952 = vunpack.c.l.b16 %v504
        %v953 = vunpack.c.l.b16 %v505
        %v954 = vunpack.c.l.b16 %v506
        %v955 = vpack.c.b16 %v892, %v891
        %v956 = vpack.c.b16 %v894, %v893
        %v957 = vpack.c.b16 %v896, %v895
        %v958 = vpack.c.b16 %v898, %v897
        %v959 = vpack.c.b16 %v900, %v899
        %v960 = vpack.c.b16 %v902, %v901
        %v961 = vpack.c.b16 %v904, %v903
        %v962 = vpack.c.b16 %v906, %v905
        %v963 = vpack.c.b16 %v908, %v907
        %v964 = vpack.c.b16 %v910, %v909
        %v965 = vpack.c.b16 %v912, %v911
        %v966 = vpack.c.b16 %v914, %v913
        %v967 = vpack.c.b16 %v916, %v915
        %v968 = vpack.c.b16 %v918, %v917
        %v969 = vpack.c.b16 %v920, %v919
        %v970 = vpack.c.b16 %v922, %v921
        %v971 = vpack.c.b16 %v924, %v923
        %v972 = vpack.c.b16 %v926, %v925
        %v973 = vpack.c.b16 %v928, %v927
        %v974 = vpack.c.b16 %v930, %v929
        %v975 = vpack.c.b16 %v932, %v931
        %v976 = vpack.c.b16 %v934, %v933
        %v977 = vpack.c.b16 %v936, %v935
        %v978 = vpack.c.b16 %v938, %v937
        %v979 = vpack.c.b16 %v940, %v939
        %v980 = vpack.c.b16 %v942, %v941
        %v981 = vpack.c.b16 %v944, %v943
        %v982 = vpack.c.b16 %v946, %v945
        %v983 = vpack.c.b16 %v948, %v947
        %v984 = vpack.c.b16 %v950, %v949
        %v985 = vpack.c.b16 %v952, %v951
        %v986 = vpack.c.b16 %v954, %v953
        %1019 = vmatprep.subr.bf16.mxu0 0
        %1020 = vmatpush1.bf16.msra.mxu0 %v955
        %1021 = vmatprep.subr.bf16.mxu0 0
        %1022 = vmatpush1.bf16.msra.mxu0 %v956
        %1023 = vmatprep.subr.bf16.mxu0 0
        %1024 = vmatpush1.bf16.msra.mxu0 %v957
        %1025 = vmatprep.subr.bf16.mxu0 0
        %1026 = vmatpush1.bf16.msra.mxu0 %v958
        %1027 = vmatprep.subr.bf16.mxu0 0
        %1028 = vmatpush1.bf16.msra.mxu0 %v959
        %1029 = vmatprep.subr.bf16.mxu0 0
        %1030 = vmatpush1.bf16.msra.mxu0 %v960
        %1031 = vmatprep.subr.bf16.mxu0 0
        %1032 = vmatpush1.bf16.msra.mxu0 %v961
        %1033 = vmatprep.subr.bf16.mxu0 0
        %1034 = vmatpush1.bf16.msra.mxu0 %v962
        %1035 = vmatprep.subr.bf16.mxu0 0
        %1036 = vmatpush1.bf16.msra.mxu0 %v963
        %1037 = vmatprep.subr.bf16.mxu0 0
        %1038 = vmatpush1.bf16.msra.mxu0 %v964
        %1039 = vmatprep.subr.bf16.mxu0 0
        %1040 = vmatpush1.bf16.msra.mxu0 %v965
        %1041 = vmatprep.subr.bf16.mxu0 0
        %1042 = vmatpush1.bf16.msra.mxu0 %v966
        %1043 = vmatprep.subr.bf16.mxu0 0
        %1044 = vmatpush1.bf16.msra.mxu0 %v967
        %1045 = vmatprep.subr.bf16.mxu0 0
        %1046 = vmatpush1.bf16.msra.mxu0 %v968
        %1047 = vmatprep.subr.bf16.mxu0 0
        %1048 = vmatpush1.bf16.msra.mxu0 %v969
        %1049 = vmatprep.subr.bf16.mxu0 0
        %1050 = vmatpush1.bf16.msra.mxu0 %v970
        %1051 = vmatprep.mubr.bf16.mxu0 %v700
        %1052 = vmatmul.mubr.bf16.gmra.mrb[0].mxu0 %v699
        %v1053 = vpop.f32.mrb[0].mxu0
        %v1054 = vadd.f32 0.0, %v1053
        %v1055 = vpop.f32.mrb[0].mxu0
        %v1056 = vpop.f32.mrb[0].mxu0
        %v1057 = vadd.f32 0.0, %v1056
        %v1058 = vpop.f32.mrb[0].mxu0
        %1059 = vmatprep.mubr.bf16.mxu0 %v704
        %1060 = vmatmul.mubr.bf16.gmra.mrb[0].mxu0 %v703
        %v1061 = vpop.f32.mrb[0].mxu0
        %v1062 = vadd.f32 0.0, %v1061
        %v1063 = vpop.f32.mrb[0].mxu0
        %v1064 = vpop.f32.mrb[0].mxu0
        %v1065 = vadd.f32 0.0, %v1064
        %v1066 = vpop.f32.mrb[0].mxu0
        %1067 = vmatprep.mubr.bf16.mxu0 %v708
        %1068 = vmatmul.mubr.bf16.gmra.mrb[0].mxu0 %v707
        %v1069 = vpop.f32.mrb[0].mxu0
        %v1070 = vadd.f32 0.0, %v1069
        %v1071 = vpop.f32.mrb[0].mxu0
        %v1072 = vpop.f32.mrb[0].mxu0
        %v1073 = vadd.f32 0.0, %v1072
        %v1074 = vpop.f32.mrb[0].mxu0
        %1075 = vmatprep.mubr.bf16.mxu0 %v712
        %1076 = vmatmul.mubr.bf16.gmra.mrb[0].mxu0 %v711
        %v1077 = vpop.f32.mrb[0].mxu0
        %v1078 = vadd.f32 0.0, %v1077
        %v1079 = vpop.f32.mrb[0].mxu0
        %v1080 = vpop.f32.mrb[0].mxu0
        %v1081 = vadd.f32 0.0, %v1080
        %v1082 = vpop.f32.mrb[0].mxu0
        %1083 = vmatprep.mubr.bf16.mxu0 %v716
        %1084 = vmatmul.mubr.bf16.gmra.mrb[0].mxu0 %v715
        %v1085 = vpop.f32.mrb[0].mxu0
        %v1086 = vadd.f32 0.0, %v1085
        %v1087 = vpop.f32.mrb[0].mxu0
        %v1088 = vpop.f32.mrb[0].mxu0
        %v1089 = vadd.f32 0.0, %v1088
        %v1090 = vpop.f32.mrb[0].mxu0
        %1091 = vmatprep.mubr.bf16.mxu0 %v720
        %1092 = vmatmul.mubr.bf16.gmra.mrb[0].mxu0 %v719
        %v1093 = vpop.f32.mrb[0].mxu0
        %v1094 = vadd.f32 0.0, %v1093
        %v1095 = vpop.f32.mrb[0].mxu0
        %v1096 = vpop.f32.mrb[0].mxu0
        %v1097 = vadd.f32 0.0, %v1096
        %v1098 = vpop.f32.mrb[0].mxu0
        %1099 = vmatprep.mubr.bf16.mxu0 %v724
        %1100 = vmatmul.mubr.bf16.gmra.mrb[0].mxu0 %v723
        %v1101 = vpop.f32.mrb[0].mxu0
        %v1102 = vadd.f32 0.0, %v1101
        %v1103 = vpop.f32.mrb[0].mxu0
        %v1104 = vpop.f32.mrb[0].mxu0
        %v1105 = vadd.f32 0.0, %v1104
        %v1106 = vpop.f32.mrb[0].mxu0
        %1107 = vmatprep.mubr.bf16.mxu0 %v728
        %1108 = vmatmul.mubr.bf16.gmra.mrb[0].mxu0 %v727
        %v1109 = vpop.f32.mrb[0].mxu0
        %v1110 = vadd.f32 0.0, %v1109
        %v1111 = vpop.f32.mrb[0].mxu0
        %v1112 = vpop.f32.mrb[0].mxu0
        %v1113 = vadd.f32 0.0, %v1112
        %v1114 = vpop.f32.mrb[0].mxu0
        %1115 = vmatprep.mubr.bf16.mxu0 %v732
        %1116 = vmatmul.mubr.bf16.gmra.mrb[0].mxu0 %v731
        %v1117 = vpop.f32.mrb[0].mxu0
        %v1118 = vadd.f32 0.0, %v1117
        %v1119 = vpop.f32.mrb[0].mxu0
        %v1120 = vpop.f32.mrb[0].mxu0
        %v1121 = vadd.f32 0.0, %v1120
        %v1122 = vpop.f32.mrb[0].mxu0
        %1123 = vmatprep.mubr.bf16.mxu0 %v736
        %1124 = vmatmul.mubr.bf16.gmra.mrb[0].mxu0 %v735
        %v1125 = vpop.f32.mrb[0].mxu0
        %v1126 = vadd.f32 0.0, %v1125
        %v1127 = vpop.f32.mrb[0].mxu0
        %v1128 = vpop.f32.mrb[0].mxu0
        %v1129 = vadd.f32 0.0, %v1128
        %v1130 = vpop.f32.mrb[0].mxu0
        %1131 = vmatprep.mubr.bf16.mxu0 %v740
        %1132 = vmatmul.mubr.bf16.gmra.mrb[0].mxu0 %v739
        %v1133 = vpop.f32.mrb[0].mxu0
        %v1134 = vadd.f32 0.0, %v1133
        %v1135 = vpop.f32.mrb[0].mxu0
        %v1136 = vpop.f32.mrb[0].mxu0
        %v1137 = vadd.f32 0.0, %v1136
        %v1138 = vpop.f32.mrb[0].mxu0
        %1139 = vmatprep.mubr.bf16.mxu0 %v744
        %1140 = vmatmul.mubr.bf16.gmra.mrb[0].mxu0 %v743
        %v1141 = vpop.f32.mrb[0].mxu0
        %v1142 = vadd.f32 0.0, %v1141
        %v1143 = vpop.f32.mrb[0].mxu0
        %v1144 = vpop.f32.mrb[0].mxu0
        %v1145 = vadd.f32 0.0, %v1144
        %v1146 = vpop.f32.mrb[0].mxu0
        %1147 = vmatprep.mubr.bf16.mxu0 %v748
        %1148 = vmatmul.mubr.bf16.gmra.mrb[0].mxu0 %v747
        %v1149 = vpop.f32.mrb[0].mxu0
        %v1150 = vadd.f32 0.0, %v1149
        %v1151 = vpop.f32.mrb[0].mxu0
        %v1152 = vpop.f32.mrb[0].mxu0
        %v1153 = vadd.f32 0.0, %v1152
        %v1154 = vpop.f32.mrb[0].mxu0
        %1155 = vmatprep.mubr.bf16.mxu0 %v752
        %1156 = vmatmul.mubr.bf16.gmra.mrb[0].mxu0 %v751
        %v1157 = vpop.f32.mrb[0].mxu0
        %v1158 = vadd.f32 0.0, %v1157
        %v1159 = vpop.f32.mrb[0].mxu0
        %v1160 = vpop.f32.mrb[0].mxu0
        %v1161 = vadd.f32 0.0, %v1160
        %v1162 = vpop.f32.mrb[0].mxu0
        %1163 = vmatprep.mubr.bf16.mxu0 %v756
        %1164 = vmatmul.mubr.bf16.gmra.mrb[0].mxu0 %v755
        %v1165 = vpop.f32.mrb[0].mxu0
        %v1166 = vadd.f32 0.0, %v1165
        %v1167 = vpop.f32.mrb[0].mxu0
        %v1168 = vpop.f32.mrb[0].mxu0
        %v1169 = vadd.f32 0.0, %v1168
        %v1170 = vpop.f32.mrb[0].mxu0
        %1171 = vmatprep.mubr.bf16.mxu0 %v760
        %1172 = vmatmul.mubr.bf16.gmra.mrb[0].mxu0 %v759
        %v1173 = vpop.f32.mrb[0].mxu0
        %v1174 = vadd.f32 0.0, %v1173
        %v1175 = vpop.f32.mrb[0].mxu0
        %v1176 = vpop.f32.mrb[0].mxu0
        %v1177 = vadd.f32 0.0, %v1176
        %v1178 = vpop.f32.mrb[0].mxu0
        %1179 = vdwg.mxu0
        %1180 = vmatprep.subr.bf16.mxu0 0
        %1181 = vmatpush1.bf16.msra.mxu0 %v971
        %1182 = vmatprep.subr.bf16.mxu0 0
        %1183 = vmatpush1.bf16.msra.mxu0 %v972
        %1184 = vmatprep.subr.bf16.mxu0 0
        %1185 = vmatpush1.bf16.msra.mxu0 %v973
        %1186 = vmatprep.subr.bf16.mxu0 0
        %1187 = vmatpush1.bf16.msra.mxu0 %v974
        %1188 = vmatprep.subr.bf16.mxu0 0
        %1189 = vmatpush1.bf16.msra.mxu0 %v975
        %1190 = vmatprep.subr.bf16.mxu0 0
        %1191 = vmatpush1.bf16.msra.mxu0 %v976
        %1192 = vmatprep.subr.bf16.mxu0 0
        %1193 = vmatpush1.bf16.msra.mxu0 %v977
        %1194 = vmatprep.subr.bf16.mxu0 0
        %1195 = vmatpush1.bf16.msra.mxu0 %v978
        %1196 = vmatprep.subr.bf16.mxu0 0
        %1197 = vmatpush1.bf16.msra.mxu0 %v979
        %1198 = vmatprep.subr.bf16.mxu0 0
        %1199 = vmatpush1.bf16.msra.mxu0 %v980
        %1200 = vmatprep.subr.bf16.mxu0 0
        %1201 = vmatpush1.bf16.msra.mxu0 %v981
        %1202 = vmatprep.subr.bf16.mxu0 0
        %1203 = vmatpush1.bf16.msra.mxu0 %v982
        %1204 = vmatprep.subr.bf16.mxu0 0
        %1205 = vmatpush1.bf16.msra.mxu0 %v983
        %1206 = vmatprep.subr.bf16.mxu0 0
        %1207 = vmatpush1.bf16.msra.mxu0 %v984
        %1208 = vmatprep.subr.bf16.mxu0 0
        %1209 = vmatpush1.bf16.msra.mxu0 %v985
        %1210 = vmatprep.subr.bf16.mxu0 0
        %1211 = vmatpush1.bf16.msra.mxu0 %v986
        %1212 = vmatprep.mubr.bf16.mxu0 %v702
        %1213 = vmatmul.mubr.bf16.gmra.mrb[0].mxu0 %v701
        %v1214 = vpop.f32.mrb[0].mxu0
        %v1215 = vadd.f32 %v1054, %v1214
        %v1216 = vpop.f32.mrb[0].mxu0
        %v1217 = vpop.f32.mrb[0].mxu0
        %v1218 = vadd.f32 %v1057, %v1217
        %v1219 = vpop.f32.mrb[0].mxu0
        %1220 = vmatprep.mubr.bf16.mxu0 %v706
        %1221 = vmatmul.mubr.bf16.gmra.mrb[0].mxu0 %v705
        %v1222 = vpop.f32.mrb[0].mxu0
        %v1223 = vadd.f32 %v1062, %v1222
        %v1224 = vpop.f32.mrb[0].mxu0
        %v1225 = vpop.f32.mrb[0].mxu0
        %v1226 = vadd.f32 %v1065, %v1225
        %v1227 = vpop.f32.mrb[0].mxu0
        %1228 = vmatprep.mubr.bf16.mxu0 %v710
        %1229 = vmatmul.mubr.bf16.gmra.mrb[0].mxu0 %v709
        %v1230 = vpop.f32.mrb[0].mxu0
        %v1231 = vadd.f32 %v1070, %v1230
        %v1232 = vpop.f32.mrb[0].mxu0
        %v1233 = vpop.f32.mrb[0].mxu0
        %v1234 = vadd.f32 %v1073, %v1233
        %v1235 = vpop.f32.mrb[0].mxu0
        %1236 = vmatprep.mubr.bf16.mxu0 %v714
        %1237 = vmatmul.mubr.bf16.gmra.mrb[0].mxu0 %v713
        %v1238 = vpop.f32.mrb[0].mxu0
        %v1239 = vadd.f32 %v1078, %v1238
        %v1240 = vpop.f32.mrb[0].mxu0
        %v1241 = vpop.f32.mrb[0].mxu0
        %v1242 = vadd.f32 %v1081, %v1241
        %v1243 = vpop.f32.mrb[0].mxu0
        %1244 = vmatprep.mubr.bf16.mxu0 %v718
        %1245 = vmatmul.mubr.bf16.gmra.mrb[0].mxu0 %v717
        %v1246 = vpop.f32.mrb[0].mxu0
        %v1247 = vadd.f32 %v1086, %v1246
        %v1248 = vpop.f32.mrb[0].mxu0
        %v1249 = vpop.f32.mrb[0].mxu0
        %v1250 = vadd.f32 %v1089, %v1249
        %v1251 = vpop.f32.mrb[0].mxu0
        %1252 = vmatprep.mubr.bf16.mxu0 %v722
        %1253 = vmatmul.mubr.bf16.gmra.mrb[0].mxu0 %v721
        %v1254 = vpop.f32.mrb[0].mxu0
        %v1255 = vadd.f32 %v1094, %v1254
        %v1256 = vpop.f32.mrb[0].mxu0
        %v1257 = vpop.f32.mrb[0].mxu0
        %v1258 = vadd.f32 %v1097, %v1257
        %v1259 = vpop.f32.mrb[0].mxu0
        %1260 = vmatprep.mubr.bf16.mxu0 %v726
        %1261 = vmatmul.mubr.bf16.gmra.mrb[0].mxu0 %v725
        %v1262 = vpop.f32.mrb[0].mxu0
        %v1263 = vadd.f32 %v1102, %v1262
        %v1264 = vpop.f32.mrb[0].mxu0
        %v1265 = vpop.f32.mrb[0].mxu0
        %v1266 = vadd.f32 %v1105, %v1265
        %v1267 = vpop.f32.mrb[0].mxu0
        %1268 = vmatprep.mubr.bf16.mxu0 %v730
        %1269 = vmatmul.mubr.bf16.gmra.mrb[0].mxu0 %v729
        %v1270 = vpop.f32.mrb[0].mxu0
        %v1271 = vadd.f32 %v1110, %v1270
        %v1272 = vpop.f32.mrb[0].mxu0
        %v1273 = vpop.f32.mrb[0].mxu0
        %v1274 = vadd.f32 %v1113, %v1273
        %v1275 = vpop.f32.mrb[0].mxu0
        %1276 = vmatprep.mubr.bf16.mxu0 %v734
        %1277 = vmatmul.mubr.bf16.gmra.mrb[0].mxu0 %v733
        %v1278 = vpop.f32.mrb[0].mxu0
        %v1279 = vadd.f32 %v1118, %v1278
        %v1280 = vpop.f32.mrb[0].mxu0
        %v1281 = vpop.f32.mrb[0].mxu0
        %v1282 = vadd.f32 %v1121, %v1281
        %v1283 = vpop.f32.mrb[0].mxu0
        %1284 = vmatprep.mubr.bf16.mxu0 %v738
        %1285 = vmatmul.mubr.bf16.gmra.mrb[0].mxu0 %v737
        %v1286 = vpop.f32.mrb[0].mxu0
        %v1287 = vadd.f32 %v1126, %v1286
        %v1288 = vpop.f32.mrb[0].mxu0
        %v1289 = vpop.f32.mrb[0].mxu0
        %v1290 = vadd.f32 %v1129, %v1289
        %v1291 = vpop.f32.mrb[0].mxu0
        %1292 = vmatprep.mubr.bf16.mxu0 %v742
        %1293 = vmatmul.mubr.bf16.gmra.mrb[0].mxu0 %v741
        %v1294 = vpop.f32.mrb[0].mxu0
        %v1295 = vadd.f32 %v1134, %v1294
        %v1296 = vpop.f32.mrb[0].mxu0
        %v1297 = vpop.f32.mrb[0].mxu0
        %v1298 = vadd.f32 %v1137, %v1297
        %v1299 = vpop.f32.mrb[0].mxu0
        %1300 = vmatprep.mubr.bf16.mxu0 %v746
        %1301 = vmatmul.mubr.bf16.gmra.mrb[0].mxu0 %v745
        %v1302 = vpop.f32.mrb[0].mxu0
        %v1303 = vadd.f32 %v1142, %v1302
        %v1304 = vpop.f32.mrb[0].mxu0
        %v1305 = vpop.f32.mrb[0].mxu0
        %v1306 = vadd.f32 %v1145, %v1305
        %v1307 = vpop.f32.mrb[0].mxu0
        %1308 = vmatprep.mubr.bf16.mxu0 %v750
        %1309 = vmatmul.mubr.bf16.gmra.mrb[0].mxu0 %v749
        %v1310 = vpop.f32.mrb[0].mxu0
        %v1311 = vadd.f32 %v1150, %v1310
        %v1312 = vpop.f32.mrb[0].mxu0
        %v1313 = vpop.f32.mrb[0].mxu0
        %v1314 = vadd.f32 %v1153, %v1313
        %v1315 = vpop.f32.mrb[0].mxu0
        %1316 = vmatprep.mubr.bf16.mxu0 %v754
        %1317 = vmatmul.mubr.bf16.gmra.mrb[0].mxu0 %v753
        %v1318 = vpop.f32.mrb[0].mxu0
        %v1319 = vadd.f32 %v1158, %v1318
        %v1320 = vpop.f32.mrb[0].mxu0
        %v1321 = vpop.f32.mrb[0].mxu0
        %v1322 = vadd.f32 %v1161, %v1321
        %v1323 = vpop.f32.mrb[0].mxu0
        %1324 = vmatprep.mubr.bf16.mxu0 %v758
        %1325 = vmatmul.mubr.bf16.gmra.mrb[0].mxu0 %v757
        %v1326 = vpop.f32.mrb[0].mxu0
        %v1327 = vadd.f32 %v1166, %v1326
        %v1328 = vpop.f32.mrb[0].mxu0
        %v1329 = vpop.f32.mrb[0].mxu0
        %v1330 = vadd.f32 %v1169, %v1329
        %v1331 = vpop.f32.mrb[0].mxu0
        %1332 = vmatprep.mubr.bf16.mxu0 %v762
        %1333 = vmatmul.mubr.bf16.gmra.mrb[0].mxu0 %v761
        %v1334 = vpop.f32.mrb[0].mxu0
        %v1335 = vadd.f32 %v1174, %v1334
        %v1336 = vpop.f32.mrb[0].mxu0
        %v1337 = vpop.f32.mrb[0].mxu0
        %v1338 = vadd.f32 %v1177, %v1337
        %v1339 = vpop.f32.mrb[0].mxu0
        %1340 = vdwg.mxu0
        %v1341 = vadd.f32 %v347, %v1215
        %v1342 = vadd.f32 %v348, %v1218
        %v1343 = vadd.f32 %v349, %v1223
        %v1344 = vadd.f32 %v350, %v1226
        %v1345 = vadd.f32 %v351, %v1231
        %v1346 = vadd.f32 %v352, %v1234
        %v1347 = vadd.f32 %v353, %v1239
        %v1348 = vadd.f32 %v354, %v1242
        %v1349 = vadd.f32 %v355, %v1247
        %v1350 = vadd.f32 %v356, %v1250
        %v1351 = vadd.f32 %v357, %v1255
        %v1352 = vadd.f32 %v358, %v1258
        %v1353 = vadd.f32 %v359, %v1263
        %v1354 = vadd.f32 %v360, %v1266
        %v1355 = vadd.f32 %v361, %v1271
        %v1356 = vadd.f32 %v362, %v1274
        %v1357 = vadd.f32 %v363, %v1279
        %v1358 = vadd.f32 %v364, %v1282
        %v1359 = vadd.f32 %v365, %v1287
        %v1360 = vadd.f32 %v366, %v1290
        %v1361 = vadd.f32 %v367, %v1295
        %v1362 = vadd.f32 %v368, %v1298
        %v1363 = vadd.f32 %v369, %v1303
        %v1364 = vadd.f32 %v370, %v1306
        %v1365 = vadd.f32 %v371, %v1311
        %v1366 = vadd.f32 %v372, %v1314
        %v1367 = vadd.f32 %v373, %v1319
        %v1368 = vadd.f32 %v374, %v1322
        %v1369 = vadd.f32 %v375, %v1327
        %v1370 = vadd.f32 %v376, %v1330
        %v1371 = vadd.f32 %v377, %v1335
        %v1372 = vadd.f32 %v378, %v1338
        %1373 = vst [vmem:[#allocation2] sm:$0xff] %v1341
        %1374 = vst [vmem:[#allocation2 + $0x8] sm:$0xff] %v1342
        %1375 = vst [vmem:[#allocation2 + $0x10] sm:$0xff] %v1343
        %1376 = vst [vmem:[#allocation2 + $0x18] sm:$0xff] %v1344
        %1377 = vst [vmem:[#allocation2 + $0x20] sm:$0xff] %v1345
        %1378 = vst [vmem:[#allocation2 + $0x28] sm:$0xff] %v1346
        %1379 = vst [vmem:[#allocation2 + $0x30] sm:$0xff] %v1347
        %1380 = vst [vmem:[#allocation2 + $0x38] sm:$0xff] %v1348
        %1381 = vst [vmem:[#allocation2 + $0x40] sm:$0xff] %v1349
        %1382 = vst [vmem:[#allocation2 + $0x48] sm:$0xff] %v1350
        %1383 = vst [vmem:[#allocation2 + $0x50] sm:$0xff] %v1351
        %1384 = vst [vmem:[#allocation2 + $0x58] sm:$0xff] %v1352
        %1385 = vst [vmem:[#allocation2 + $0x60] sm:$0xff] %v1353
        %1386 = vst [vmem:[#allocation2 + $0x68] sm:$0xff] %v1354
        %1387 = vst [vmem:[#allocation2 + $0x70] sm:$0xff] %v1355
        %1388 = vst [vmem:[#allocation2 + $0x78] sm:$0xff] %v1356
        %1389 = vst [vmem:[#allocation2 + $0x80] sm:$0xff] %v1357
        %1390 = vst [vmem:[#allocation2 + $0x88] sm:$0xff] %v1358
        %1391 = vst [vmem:[#allocation2 + $0x90] sm:$0xff] %v1359
        %1392 = vst [vmem:[#allocation2 + $0x98] sm:$0xff] %v1360
        %1393 = vst [vmem:[#allocation2 + $0xa0] sm:$0xff] %v1361
        %1394 = vst [vmem:[#allocation2 + $0xa8] sm:$0xff] %v1362
        %1395 = vst [vmem:[#allocation2 + $0xb0] sm:$0xff] %v1363
        %1396 = vst [vmem:[#allocation2 + $0xb8] sm:$0xff] %v1364
        %1397 = vst [vmem:[#allocation2 + $0xc0] sm:$0xff] %v1365
        %1398 = vst [vmem:[#allocation2 + $0xc8] sm:$0xff] %v1366
        %1399 = vst [vmem:[#allocation2 + $0xd0] sm:$0xff] %v1367
        %1400 = vst [vmem:[#allocation2 + $0xd8] sm:$0xff] %v1368
        %1401 = vst [vmem:[#allocation2 + $0xe0] sm:$0xff] %v1369
        %1402 = vst [vmem:[#allocation2 + $0xe8] sm:$0xff] %v1370
        %1403 = vst [vmem:[#allocation2 + $0xf0] sm:$0xff] %v1371
        %1404 = vst [vmem:[#allocation2 + $0xf8] sm:$0xff] %v1372
        // Predicated region
        $region49: #{tpu_custom_call.1} parent=31 // pred_check
          %p1405 = pneg %p311
        $region50: #{tpu_custom_call.1} parent=31 // pred_check_branch
          %1407 = sbr.rel (%p1405) target = $region52
        $region51: #{tpu_custom_call.1} parent=31 // pred_region
          %v1408 = vld [vmem:[#allocation2] sm:$0xff]
          %v1409 = vld [vmem:[#allocation2 + $0x8] sm:$0xff]
          %v1410 = vld [vmem:[#allocation2 + $0x10] sm:$0xff]
          %v1411 = vld [vmem:[#allocation2 + $0x18] sm:$0xff]
          %v1412 = vld [vmem:[#allocation2 + $0x20] sm:$0xff]
          %v1413 = vld [vmem:[#allocation2 + $0x28] sm:$0xff]
          %v1414 = vld [vmem:[#allocation2 + $0x30] sm:$0xff]
          %v1415 = vld [vmem:[#allocation2 + $0x38] sm:$0xff]
          %v1416 = vld [vmem:[#allocation2 + $0x40] sm:$0xff]
          %v1417 = vld [vmem:[#allocation2 + $0x48] sm:$0xff]
          %v1418 = vld [vmem:[#allocation2 + $0x50] sm:$0xff]
          %v1419 = vld [vmem:[#allocation2 + $0x58] sm:$0xff]
          %v1420 = vld [vmem:[#allocation2 + $0x60] sm:$0xff]
          %v1421 = vld [vmem:[#allocation2 + $0x68] sm:$0xff]
          %v1422 = vld [vmem:[#allocation2 + $0x70] sm:$0xff]
          %v1423 = vld [vmem:[#allocation2 + $0x78] sm:$0xff]
          %v1424 = vld [vmem:[#allocation2 + $0x80] sm:$0xff]
          %v1425 = vld [vmem:[#allocation2 + $0x88] sm:$0xff]
          %v1426 = vld [vmem:[#allocation2 + $0x90] sm:$0xff]
          %v1427 = vld [vmem:[#allocation2 + $0x98] sm:$0xff]
          %v1428 = vld [vmem:[#allocation2 + $0xa0] sm:$0xff]
          %v1429 = vld [vmem:[#allocation2 + $0xa8] sm:$0xff]
          %v1430 = vld [vmem:[#allocation2 + $0xb0] sm:$0xff]
          %v1431 = vld [vmem:[#allocation2 + $0xb8] sm:$0xff]
          %v1432 = vld [vmem:[#allocation2 + $0xc0] sm:$0xff]
          %v1433 = vld [vmem:[#allocation2 + $0xc8] sm:$0xff]
          %v1434 = vld [vmem:[#allocation2 + $0xd0] sm:$0xff]
          %v1435 = vld [vmem:[#allocation2 + $0xd8] sm:$0xff]
          %v1436 = vld [vmem:[#allocation2 + $0xe0] sm:$0xff]
          %v1437 = vld [vmem:[#allocation2 + $0xe8] sm:$0xff]
          %v1438 = vld [vmem:[#allocation2 + $0xf0] sm:$0xff]
          %v1439 = vld [vmem:[#allocation2 + $0xf8] sm:$0xff]
          %v1440 = vpack.c.bf16 %v1409, %v1408
          %v1441 = vpack.c.bf16 %v1411, %v1410
          %v1442 = vpack.c.bf16 %v1413, %v1412
          %v1443 = vpack.c.bf16 %v1415, %v1414
          %v1444 = vpack.c.bf16 %v1417, %v1416
          %v1445 = vpack.c.bf16 %v1419, %v1418
          %v1446 = vpack.c.bf16 %v1421, %v1420
          %v1447 = vpack.c.bf16 %v1423, %v1422
          %v1448 = vpack.c.bf16 %v1425, %v1424
          %v1449 = vpack.c.bf16 %v1427, %v1426
          %v1450 = vpack.c.bf16 %v1429, %v1428
          %v1451 = vpack.c.bf16 %v1431, %v1430
          %v1452 = vpack.c.bf16 %v1433, %v1432
          %v1453 = vpack.c.bf16 %v1435, %v1434
          %v1454 = vpack.c.bf16 %v1437, %v1436
          %v1455 = vpack.c.bf16 %v1439, %v1438
          %v1472 = vunpack.c.l.b16 %v1440
          %v1473 = vunpack.c.h.b16 %v1440
          %v1474 = vunpack.c.l.b16 %v1441
          %v1475 = vunpack.c.h.b16 %v1441
          %v1476 = vunpack.c.l.b16 %v1442
          %v1477 = vunpack.c.h.b16 %v1442
          %v1478 = vunpack.c.l.b16 %v1443
          %v1479 = vunpack.c.h.b16 %v1443
          %v1480 = vunpack.c.l.b16 %v1444
          %v1481 = vunpack.c.h.b16 %v1444
          %v1482 = vunpack.c.l.b16 %v1445
          %v1483 = vunpack.c.h.b16 %v1445
          %v1484 = vunpack.c.l.b16 %v1446
          %v1485 = vunpack.c.h.b16 %v1446
          %v1486 = vunpack.c.l.b16 %v1447
          %v1487 = vunpack.c.h.b16 %v1447
          %v1488 = vunpack.c.l.b16 %v1448
          %v1489 = vunpack.c.h.b16 %v1448
          %v1490 = vunpack.c.l.b16 %v1449
          %v1491 = vunpack.c.h.b16 %v1449
          %v1492 = vunpack.c.l.b16 %v1450
          %v1493 = vunpack.c.h.b16 %v1450
          %v1494 = vunpack.c.l.b16 %v1451
          %v1495 = vunpack.c.h.b16 %v1451
          %v1496 = vunpack.c.l.b16 %v1452
          %v1497 = vunpack.c.h.b16 %v1452
          %v1498 = vunpack.c.l.b16 %v1453
          %v1499 = vunpack.c.h.b16 %v1453
          %v1500 = vunpack.c.l.b16 %v1454
          %v1501 = vunpack.c.h.b16 %v1454
          %v1502 = vunpack.c.l.b16 %v1455
          %v1503 = vunpack.c.h.b16 %v1455
          %v1504 = vpack.c.b16 %v1472, %v1472
          %v1505 = vpack.c.b16 %v1473, %v1473
          %v1506 = vpack.c.b16 %v1474, %v1474
          %v1507 = vpack.c.b16 %v1475, %v1475
          %v1508 = vpack.c.b16 %v1476, %v1476
          %v1509 = vpack.c.b16 %v1477, %v1477
          %v1510 = vpack.c.b16 %v1478, %v1478
          %v1511 = vpack.c.b16 %v1479, %v1479
          %v1512 = vpack.c.b16 %v1480, %v1480
          %v1513 = vpack.c.b16 %v1481, %v1481
          %v1514 = vpack.c.b16 %v1482, %v1482
          %v1515 = vpack.c.b16 %v1483, %v1483
          %v1516 = vpack.c.b16 %v1484, %v1484
          %v1517 = vpack.c.b16 %v1485, %v1485
          %v1518 = vpack.c.b16 %v1486, %v1486
          %v1519 = vpack.c.b16 %v1487, %v1487
          %v1520 = vpack.c.b16 %v1488, %v1488
          %v1521 = vpack.c.b16 %v1489, %v1489
          %v1522 = vpack.c.b16 %v1490, %v1490
          %v1523 = vpack.c.b16 %v1491, %v1491
          %v1524 = vpack.c.b16 %v1492, %v1492
          %v1525 = vpack.c.b16 %v1493, %v1493
          %v1526 = vpack.c.b16 %v1494, %v1494
          %v1527 = vpack.c.b16 %v1495, %v1495
          %v1528 = vpack.c.b16 %v1496, %v1496
          %v1529 = vpack.c.b16 %v1497, %v1497
          %v1530 = vpack.c.b16 %v1498, %v1498
          %v1531 = vpack.c.b16 %v1499, %v1499
          %v1532 = vpack.c.b16 %v1500, %v1500
          %v1533 = vpack.c.b16 %v1501, %v1501
          %v1534 = vpack.c.b16 %v1502, %v1502
          %v1535 = vpack.c.b16 %v1503, %v1503
          %1568 = vst [vmem:[%s296] sm:$0xf] %v1504
          %1569 = vst [vmem:[%s296 + $0x4] sm:$0xf] %v1505
          %1570 = vst [vmem:[%s296 + $0x8] sm:$0xf] %v1506
          %1571 = vst [vmem:[%s296 + $0xc] sm:$0xf] %v1507
          %1572 = vst [vmem:[%s296 + $0x10] sm:$0xf] %v1508
          %1573 = vst [vmem:[%s296 + $0x14] sm:$0xf] %v1509
          %1574 = vst [vmem:[%s296 + $0x18] sm:$0xf] %v1510
          %1575 = vst [vmem:[%s296 + $0x1c] sm:$0xf] %v1511
          %1576 = vst [vmem:[%s296 + $0x20] sm:$0xf] %v1512
          %1577 = vst [vmem:[%s296 + $0x24] sm:$0xf] %v1513
          %1578 = vst [vmem:[%s296 + $0x28] sm:$0xf] %v1514
          %1579 = vst [vmem:[%s296 + $0x2c] sm:$0xf] %v1515
          %1580 = vst [vmem:[%s296 + $0x30] sm:$0xf] %v1516
          %1581 = vst [vmem:[%s296 + $0x34] sm:$0xf] %v1517
          %1582 = vst [vmem:[%s296 + $0x38] sm:$0xf] %v1518
          %1583 = vst [vmem:[%s296 + $0x3c] sm:$0xf] %v1519
          %1584 = vst [vmem:[%s296 + $0x40] sm:$0xf] %v1520
          %1585 = vst [vmem:[%s296 + $0x44] sm:$0xf] %v1521
          %1586 = vst [vmem:[%s296 + $0x48] sm:$0xf] %v1522
          %1587 = vst [vmem:[%s296 + $0x4c] sm:$0xf] %v1523
          %1588 = vst [vmem:[%s296 + $0x50] sm:$0xf] %v1524
          %1589 = vst [vmem:[%s296 + $0x54] sm:$0xf] %v1525
          %1590 = vst [vmem:[%s296 + $0x58] sm:$0xf] %v1526
          %1591 = vst [vmem:[%s296 + $0x5c] sm:$0xf] %v1527
          %1592 = vst [vmem:[%s296 + $0x60] sm:$0xf] %v1528
          %1593 = vst [vmem:[%s296 + $0x64] sm:$0xf] %v1529
          %1594 = vst [vmem:[%s296 + $0x68] sm:$0xf] %v1530
          %1595 = vst [vmem:[%s296 + $0x6c] sm:$0xf] %v1531
          %1596 = vst [vmem:[%s296 + $0x70] sm:$0xf] %v1532
          %1597 = vst [vmem:[%s296 + $0x74] sm:$0xf] %v1533
          %1598 = vst [vmem:[%s296 + $0x78] sm:$0xf] %v1534
          %1599 = vst [vmem:[%s296 + $0x7c] sm:$0xf] %v1535
          %v1600 = vld [vmem:[%s269] sm:$0xff]
          %v1601 = vld [vmem:[%s269 + $0x8] sm:$0xff]
          %v1602 = vld [vmem:[%s269 + $0x10] sm:$0xff]
          %v1603 = vld [vmem:[%s269 + $0x18] sm:$0xff]
          %v1604 = vld [vmem:[%s269 + $0x20] sm:$0xff]
          %v1605 = vld [vmem:[%s269 + $0x28] sm:$0xff]
          %v1606 = vld [vmem:[%s269 + $0x30] sm:$0xff]
          %v1607 = vld [vmem:[%s269 + $0x38] sm:$0xff]
          %v1608 = vld [vmem:[%s269 + $0x40] sm:$0xff]
          %v1609 = vld [vmem:[%s269 + $0x48] sm:$0xff]
          %v1610 = vld [vmem:[%s269 + $0x50] sm:$0xff]
          %v1611 = vld [vmem:[%s269 + $0x58] sm:$0xff]
          %v1612 = vld [vmem:[%s269 + $0x60] sm:$0xff]
          %v1613 = vld [vmem:[%s269 + $0x68] sm:$0xff]
          %v1614 = vld [vmem:[%s269 + $0x70] sm:$0xff]
          %v1615 = vld [vmem:[%s269 + $0x78] sm:$0xff]
          %v1616 = vld [vmem:[%s269 + $0x80] sm:$0xff]
          %v1617 = vld [vmem:[%s269 + $0x88] sm:$0xff]
          %v1618 = vld [vmem:[%s269 + $0x90] sm:$0xff]
          %v1619 = vld [vmem:[%s269 + $0x98] sm:$0xff]
          %v1620 = vld [vmem:[%s269 + $0xa0] sm:$0xff]
          %v1621 = vld [vmem:[%s269 + $0xa8] sm:$0xff]
          %v1622 = vld [vmem:[%s269 + $0xb0] sm:$0xff]
          %v1623 = vld [vmem:[%s269 + $0xb8] sm:$0xff]
          %v1624 = vld [vmem:[%s269 + $0xc0] sm:$0xff]
          %v1625 = vld [vmem:[%s269 + $0xc8] sm:$0xff]
          %v1626 = vld [vmem:[%s269 + $0xd0] sm:$0xff]
          %v1627 = vld [vmem:[%s269 + $0xd8] sm:$0xff]
          %v1628 = vld [vmem:[%s269 + $0xe0] sm:$0xff]
          %v1629 = vld [vmem:[%s269 + $0xe8] sm:$0xff]
          %v1630 = vld [vmem:[%s269 + $0xf0] sm:$0xff]
          %v1631 = vld [vmem:[%s269 + $0xf8] sm:$0xff]
          %v1632 = vld [vmem:[#allocation2] sm:$0xff]
          %v1633 = vld [vmem:[#allocation2 + $0x8] sm:$0xff]
          %v1634 = vld [vmem:[#allocation2 + $0x10] sm:$0xff]
          %v1635 = vld [vmem:[#allocation2 + $0x18] sm:$0xff]
          %v1636 = vld [vmem:[#allocation2 + $0x20] sm:$0xff]
          %v1637 = vld [vmem:[#allocation2 + $0x28] sm:$0xff]
          %v1638 = vld [vmem:[#allocation2 + $0x30] sm:$0xff]
          %v1639 = vld [vmem:[#allocation2 + $0x38] sm:$0xff]
          %v1640 = vld [vmem:[#allocation2 + $0x40] sm:$0xff]
          %v1641 = vld [vmem:[#allocation2 + $0x48] sm:$0xff]
          %v1642 = vld [vmem:[#allocation2 + $0x50] sm:$0xff]
          %v1643 = vld [vmem:[#allocation2 + $0x58] sm:$0xff]
          %v1644 = vld [vmem:[#allocation2 + $0x60] sm:$0xff]
          %v1645 = vld [vmem:[#allocation2 + $0x68] sm:$0xff]
          %v1646 = vld [vmem:[#allocation2 + $0x70] sm:$0xff]
          %v1647 = vld [vmem:[#allocation2 + $0x78] sm:$0xff]
          %v1648 = vld [vmem:[#allocation2 + $0x80] sm:$0xff]
          %v1649 = vld [vmem:[#allocation2 + $0x88] sm:$0xff]
          %v1650 = vld [vmem:[#allocation2 + $0x90] sm:$0xff]
          %v1651 = vld [vmem:[#allocation2 + $0x98] sm:$0xff]
          %v1652 = vld [vmem:[#allocation2 + $0xa0] sm:$0xff]
          %v1653 = vld [vmem:[#allocation2 + $0xa8] sm:$0xff]
          %v1654 = vld [vmem:[#allocation2 + $0xb0] sm:$0xff]
          %v1655 = vld [vmem:[#allocation2 + $0xb8] sm:$0xff]
          %v1656 = vld [vmem:[#allocation2 + $0xc0] sm:$0xff]
          %v1657 = vld [vmem:[#allocation2 + $0xc8] sm:$0xff]
          %v1658 = vld [vmem:[#allocation2 + $0xd0] sm:$0xff]
          %v1659 = vld [vmem:[#allocation2 + $0xd8] sm:$0xff]
          %v1660 = vld [vmem:[#allocation2 + $0xe0] sm:$0xff]
          %v1661 = vld [vmem:[#allocation2 + $0xe8] sm:$0xff]
          %v1662 = vld [vmem:[#allocation2 + $0xf0] sm:$0xff]
          %v1663 = vld [vmem:[#allocation2 + $0xf8] sm:$0xff]
          %v1664 = vadd.f32 %v1600, %v1632
          %v1665 = vadd.f32 %v1601, %v1633
          %v1666 = vadd.f32 %v1602, %v1634
          %v1667 = vadd.f32 %v1603, %v1635
          %v1668 = vadd.f32 %v1604, %v1636
          %v1669 = vadd.f32 %v1605, %v1637
          %v1670 = vadd.f32 %v1606, %v1638
          %v1671 = vadd.f32 %v1607, %v1639
          %v1672 = vadd.f32 %v1608, %v1640
          %v1673 = vadd.f32 %v1609, %v1641
          %v1674 = vadd.f32 %v1610, %v1642
          %v1675 = vadd.f32 %v1611, %v1643
          %v1676 = vadd.f32 %v1612, %v1644
          %v1677 = vadd.f32 %v1613, %v1645
          %v1678 = vadd.f32 %v1614, %v1646
          %v1679 = vadd.f32 %v1615, %v1647
          %v1680 = vadd.f32 %v1616, %v1648
          %v1681 = vadd.f32 %v1617, %v1649
          %v1682 = vadd.f32 %v1618, %v1650
          %v1683 = vadd.f32 %v1619, %v1651
          %v1684 = vadd.f32 %v1620, %v1652
          %v1685 = vadd.f32 %v1621, %v1653
          %v1686 = vadd.f32 %v1622, %v1654
          %v1687 = vadd.f32 %v1623, %v1655
          %v1688 = vadd.f32 %v1624, %v1656
          %v1689 = vadd.f32 %v1625, %v1657
          %v1690 = vadd.f32 %v1626, %v1658
          %v1691 = vadd.f32 %v1627, %v1659
          %v1692 = vadd.f32 %v1628, %v1660
          %v1693 = vadd.f32 %v1629, %v1661
          %v1694 = vadd.f32 %v1630, %v1662
          %v1695 = vadd.f32 %v1631, %v1663
          %1696 = vst [vmem:[%s303] sm:$0xff] %v1664
          %1697 = vst [vmem:[%s303 + $0x8] sm:$0xff] %v1665
          %1698 = vst [vmem:[%s303 + $0x10] sm:$0xff] %v1666
          %1699 = vst [vmem:[%s303 + $0x18] sm:$0xff] %v1667
          %1700 = vst [vmem:[%s303 + $0x20] sm:$0xff] %v1668
          %1701 = vst [vmem:[%s303 + $0x28] sm:$0xff] %v1669
          %1702 = vst [vmem:[%s303 + $0x30] sm:$0xff] %v1670
          %1703 = vst [vmem:[%s303 + $0x38] sm:$0xff] %v1671
          %1704 = vst [vmem:[%s303 + $0x40] sm:$0xff] %v1672
          %1705 = vst [vmem:[%s303 + $0x48] sm:$0xff] %v1673
          %1706 = vst [vmem:[%s303 + $0x50] sm:$0xff] %v1674
          %1707 = vst [vmem:[%s303 + $0x58] sm:$0xff] %v1675
          %1708 = vst [vmem:[%s303 + $0x60] sm:$0xff] %v1676
          %1709 = vst [vmem:[%s303 + $0x68] sm:$0xff] %v1677
          %1710 = vst [vmem:[%s303 + $0x70] sm:$0xff] %v1678
          %1711 = vst [vmem:[%s303 + $0x78] sm:$0xff] %v1679
          %1712 = vst [vmem:[%s303 + $0x80] sm:$0xff] %v1680
          %1713 = vst [vmem:[%s303 + $0x88] sm:$0xff] %v1681
          %1714 = vst [vmem:[%s303 + $0x90] sm:$0xff] %v1682
          %1715 = vst [vmem:[%s303 + $0x98] sm:$0xff] %v1683
          %1716 = vst [vmem:[%s303 + $0xa0] sm:$0xff] %v1684
          %1717 = vst [vmem:[%s303 + $0xa8] sm:$0xff] %v1685
          %1718 = vst [vmem:[%s303 + $0xb0] sm:$0xff] %v1686
          %1719 = vst [vmem:[%s303 + $0xb8] sm:$0xff] %v1687
          %1720 = vst [vmem:[%s303 + $0xc0] sm:$0xff] %v1688
          %1721 = vst [vmem:[%s303 + $0xc8] sm:$0xff] %v1689
          %1722 = vst [vmem:[%s303 + $0xd0] sm:$0xff] %v1690
          %1723 = vst [vmem:[%s303 + $0xd8] sm:$0xff] %v1691
          %1724 = vst [vmem:[%s303 + $0xe0] sm:$0xff] %v1692
          %1725 = vst [vmem:[%s303 + $0xe8] sm:$0xff] %v1693
          %1726 = vst [vmem:[%s303 + $0xf0] sm:$0xff] %v1694
          %1727 = vst [vmem:[%s303 + $0xf8] sm:$0xff] %v1695
        $region52: #{tpu_custom_call.1} parent=31 // pred_fallthru
          _
        %s1728 = sand.u32 %s126, 1
        %s1729 = scalar_lea.sflag [#allocation5], %s1728
        %s1730 = sand.u32 %s126, 1
        %s1731 = smul.addr %s1730, 128
        %s1732 = scalar_lea.vmem [#allocation9], %s1731
        %s1733 = sand.u32 %s152, 1
        %s1734 = scalar_lea.sflag [#allocation11], %s1733
        %s1735 = sand.u32 %s152, 1
        %s1736 = smul.addr %s1735, 256
        %s1737 = scalar_lea.vmem [#allocation10], %s1736
        // Predicated region
        $region53: #{tpu_custom_call.1} parent=31 // pred_check
          %p1738 = pneg %p136
        $region54: #{tpu_custom_call.1} parent=31 // pred_check_branch
          %1740 = sbr.rel (%p1738) target = $region56
        $region55: #{tpu_custom_call.1} parent=31 // pred_region
          %s1741 = smul.u32 32, %s30
          %s1743 = ssub.s32 2048, 2048
          %1744 = vsyncadd %s1729, %s1743
          %s1745 = smul.addr %s1741, 64
          %s1746 = scalar_lea.hbm %s3, %s1745
          %s1747 = sshll.u32 %s1732, 4
          %s1748 = int_to_ptr.vmem [resolvable:$true] %s1747
          %1753 = dma.vmem_to_hbm [thread:$0]  %s1748, 2048, %s1746, %s1729, 64, 64, 4
        $region56: #{tpu_custom_call.1} parent=31 // pred_fallthru
          _
        // Predicated region
        $region57: #{tpu_custom_call.1} parent=31 // pred_check
          %p1754 = pneg %p162
        $region58: #{tpu_custom_call.1} parent=31 // pred_check_branch
          %1756 = sbr.rel (%p1754) target = $region60
        $region59: #{tpu_custom_call.1} parent=31 // pred_region
          %s1757 = smul.u32 32, %s30
          %s1759 = ssub.s32 4096, 4096
          %1760 = vsyncadd %s1734, %s1759
          %s1761 = smul.addr %s1757, 128
          %s1762 = scalar_lea.hbm %s4, %s1761
          %s1763 = sshll.u32 %s1737, 4
          %s1764 = int_to_ptr.vmem [resolvable:$true] %s1763
          %1769 = dma.vmem_to_hbm [thread:$0]  %s1764, 4096, %s1762, %s1734, 128, 128, 8
        $region60: #{tpu_custom_call.1} parent=31 // pred_fallthru
          _
      $region32: #{tpu_custom_call.1} parent=5 // pred_fallthru
        _
      %p1770 = scmp.le.s32.totalorder 2, %s21
      // Predicated region
      $region61: #{tpu_custom_call.1} parent=5 // pred_check
        %p1771 = pneg %p1770
      $region62: #{tpu_custom_call.1} parent=5 // pred_check_branch
        %1773 = sbr.rel (%p1771) target = $region64
      $region63: #{tpu_custom_call.1} parent=5 // pred_region
        %s1774 = ssub.s32 %s21, 2
        // Predicated region
        $region65: #{tpu_custom_call.1} parent=63 // pred_check
          %p1775 = pneg %p142
        $region66: #{tpu_custom_call.1} parent=63 // pred_check_branch
          %1777 = sbr.rel (%p1775) target = $region68
        $region67: #{tpu_custom_call.1} parent=63 // pred_region
          %s1778 = sand.u32 %s127, 1
          %s1779 = scalar_lea.sflag [#allocation5], %s1778
          %s1780 = sand.u32 %s127, 1
          %s1781 = smul.addr %s1780, 128
          %s1782 = scalar_lea.vmem [#allocation9], %s1781
          %1783 = dma.done %s1779, 2048
        $region68: #{tpu_custom_call.1} parent=63 // pred_fallthru
          _
        // Predicated region
        $region69: #{tpu_custom_call.1} parent=63 // pred_check
          %p1784 = pneg %p168
        $region70: #{tpu_custom_call.1} parent=63 // pred_check_branch
          %1786 = sbr.rel (%p1784) target = $region72
        $region71: #{tpu_custom_call.1} parent=63 // pred_region
          %s1787 = sand.u32 %s153, 1
          %s1788 = scalar_lea.sflag [#allocation11], %s1787
          %s1789 = sand.u32 %s153, 1
          %s1790 = smul.addr %s1789, 256
          %s1791 = scalar_lea.vmem [#allocation10], %s1790
          %1792 = dma.done %s1788, 4096
        $region72: #{tpu_custom_call.1} parent=63 // pred_fallthru
          _
      $region64: #{tpu_custom_call.1} parent=5 // pred_fallthru
        _
    $region6: #{tpu_custom_call.1} parent=1 // loop_footer
      %s25 = sadd.s32 1, %s21
    $region7: #{tpu_custom_call.1} parent=1 // loop_footer_branch
      %20 = sbr.rel target = $region3
    $region8: #{tpu_custom_call.1} parent=1 // loop_exit
      _
    %1793 = vsyncpa [#allocation4], 1
    %s1794 = scalar_lea.sflag [#allocation4], 1
    %1795 = vsyncpa %s1794, 1
    %1796 = vsyncpa [#allocation7], 1
    %1797 = vsyncpa [#allocation5], 1
    %s1798 = scalar_lea.sflag [#allocation5], 1
    %1799 = vsyncpa %s1798, 1
    %1800 = vsyncpa [#allocation11], 1
    %s1801 = scalar_lea.sflag [#allocation11], 1
    %1802 = vsyncpa %s1801, 1

</llo_original>
